<compile_context>
chip_gen: v5e
topology: v5e:2x2
jax: 0.10.0
libtpu: 0.0.40
codegen_flags: <defaults>
</compile_context>

<pallas_src>
import jax
import jax.numpy as jnp
from jax.experimental import pallas as pl
from jax.experimental.pallas import tpu as pltpu


# ----------------------------------------------------------------------------
# Network config (PINN_v: layers = [dim_input, hidden..., dim_output]).
# ----------------------------------------------------------------------------
DIM_INPUT = 3
HIDDEN = 32
DIM_OUTPUT = 3
LAYERS = [DIM_INPUT, HIDDEN, HIDDEN, HIDDEN, DIM_OUTPUT]


def _round_up(x, m):
    return ((x + m - 1) // m) * m


def _cdiv(a, b):
    return -(-a // b)


def init_params(key, layers):
    """Xavier-uniform weights (out, in) + zero biases (out,), like the PyTorch init."""
    params = []
    for i in range(len(layers) - 1):
        key, sub = jax.random.split(key)
        fan_in, fan_out = layers[i], layers[i + 1]
        bound = jnp.sqrt(6.0 / (fan_in + fan_out)).astype(jnp.float32)
        w = jax.random.uniform(sub, (fan_out, fan_in), dtype=jnp.float32,
                               minval=-bound, maxval=bound)
        b = jnp.zeros((fan_out,), dtype=jnp.float32)
        params.append((w, b))
    return params


# ----------------------------------------------------------------------------
# Pallas kernel: fused MLP forward for one lane-dense batch tile.
#   x_ref : (d_in_pad, tm)    activations, batch on lanes (only real rows)
#   w_ref : (L, dmax, dmax)   packed zero-padded weights, (out, in) orientation
#   b_ref : (L, dmax, 1)      packed zero-padded biases
#   o_ref : (d_out_pad, tm)   padded output (rows >= d_out are zero)
# ----------------------------------------------------------------------------
def _make_mlp_kernel(num_layers, d_in_pad, d_out_pad, use_bf16):
    def kernel(x_ref, w_ref, b_ref, o_ref):
        h = x_ref[...]                                   # (d_in_pad, tm) f32
        for l in range(num_layers):                      # unrolled (L is small)
            w = w_ref[l]                                 # (dmax, dmax)
            b = b_ref[l]                                 # (dmax, 1) -> lane splat
            if l == 0:
                w = w[:, :d_in_pad]                      # K: dmax -> d_in_pad
            if l == num_layers - 1:
                w = w[:d_out_pad, :]                     # M: dmax -> d_out_pad
                b = b[:d_out_pad, :]
            rhs = h.astype(jnp.bfloat16) if use_bf16 else h
            h = jnp.dot(w, rhs, preferred_element_type=jnp.float32) + b
            if l < num_layers - 1:
                h = h * jax.nn.sigmoid(h)                # Swish (one EUP logistic)
        o_ref[...] = h.astype(o_ref.dtype)
    return kernel


def _pack_params(params, dmax, *, use_bf16=False):
    """Pack per-layer (W, b) into zero-padded (L, dmax, dmax) / (L, dmax, 1)."""
    num_layers = len(params)
    w_dtype = jnp.bfloat16 if use_bf16 else jnp.float32
    w_all = jnp.zeros((num_layers, dmax, dmax), dtype=w_dtype)
    b_all = jnp.zeros((num_layers, dmax, 1), dtype=jnp.float32)
    for l, (w, b) in enumerate(params):
        out_d, in_d = w.shape
        w_all = w_all.at[l, :out_d, :in_d].set(w.astype(w_dtype))
        b_all = b_all.at[l, :out_d, 0].set(b)
    return w_all, b_all


def _choose_tiling(n, tm_req):
    """Pick a lane tile (multiple of 128) and an EVEN grid-step count (v7x: 2 TCs).

    The tile is re-fit to the even step count so single-TC chips (v5e/v6e)
    don't pay for an extra all-padding tile.
    """
    n128 = _round_up(max(n, 1), 128)
    tm = max(128, (min(tm_req, n128) // 128) * 128)
    steps = _cdiv(n128, tm)
    if n128 >= 256:
        steps = max(steps, 2)
        if steps % 2:
            steps += 1
        tm = _round_up(_cdiv(n128, steps), 128)          # minimal-padding re-fit
        steps = _cdiv(n128, tm)
        if steps % 2:                                    # rounding can re-break evenness
            steps += 1
    return tm, steps, steps * tm


def pinn_v_forward_t(x_t, params, *, tm=2048, use_bf16=False):
    """Features-major fused forward. x_t: (d_in, N) -> (d_out, N).

    Preferred entry point: the batch dim is already lane-dense, so no extra
    HBM transpose pass is needed in the wrapper.
    """
    d_in, n = x_t.shape
    num_layers = len(params)
    d_out = params[-1][0].shape[0]
    dims = [d_in] + [w.shape[0] for (w, _) in params]
    dmax = _round_up(max(dims), 8)                       # sublane-aligned width
    d_in_pad = _round_up(d_in, 8)
    d_out_pad = _round_up(d_out, 8)

    tm_sel, steps, n_pad = _choose_tiling(n, tm)

    # Lane-dense input: only the real (rounded-to-8) feature rows hit HBM.
    xt = jnp.zeros((d_in_pad, n_pad), dtype=jnp.float32).at[:d_in, :n].set(x_t)

    w_all, b_all = _pack_params(params, dmax, use_bf16=use_bf16)
    kernel = _make_mlp_kernel(num_layers, d_in_pad, d_out_pad, use_bf16)

    out = pl.pallas_call(
        kernel,
        out_shape=jax.ShapeDtypeStruct((d_out_pad, n_pad), jnp.float32),
        grid_spec=pltpu.PrefetchScalarGridSpec(
            num_scalar_prefetch=0,
            grid=(steps,),
            in_specs=[
                pl.BlockSpec((d_in_pad, tm_sel), lambda i: (0, i)),
                # Grid-invariant resident params (index_map constant).
                pl.BlockSpec((num_layers, dmax, dmax), lambda i: (0, 0, 0)),
                pl.BlockSpec((num_layers, dmax, 1), lambda i: (0, 0, 0)),
            ],
            out_specs=pl.BlockSpec((d_out_pad, tm_sel), lambda i: (0, i)),
        ),
        compiler_params=pltpu.CompilerParams(
            dimension_semantics=("parallel",),
        ),
    )(xt, w_all, b_all)

    return out[:d_out, :n]


def pinn_v_forward(x, params, *, tm=2048, use_bf16=False):
    """PyTorch-layout fused forward. x: (N, dim_input) -> (N, dim_output)."""
    # TODO(synk): keep the PINN data pipeline features-major and call
    # pinn_v_forward_t directly to skip this transpose HBM pass.
    return pinn_v_forward_t(x.T, params, tm=tm, use_bf16=use_bf16).T


# ----------------------------------------------------------------------------
# Pure-JAX reference (mirrors the PyTorch forward: x @ W.T + b, Swish).
# Uses HIGHEST matmul precision so the f32 kernel check is meaningful.
# ----------------------------------------------------------------------------
def pinn_v_reference(x, params):
    prec = jax.lax.Precision.HIGHEST
    h = x
    for (w, b) in params[:-1]:
        h = jnp.dot(h, w.T, precision=prec) + b
        h = h * jax.nn.sigmoid(h)  # Swish
    w, b = params[-1]
    return jnp.dot(h, w.T, precision=prec) + b


if __name__ == "__main__":
    key = jax.random.PRNGKey(0)
    key, pkey, xkey = jax.random.split(key, 3)

    params = init_params(pkey, LAYERS)

    # Non-multiple-of-tile batch: exercises padding + even-grid selection
    # (pads to 1024 -> grid of 2 steps of tm=512).
    N = 1000
    x = jax.random.normal(xkey, (N, DIM_INPUT), dtype=jnp.float32)

    ref = pinn_v_reference(x, params)

    # f32 path (default): tight check against the high-precision reference.
    out = jax.block_until_ready(pinn_v_forward(x, params))
    assert out.shape == (N, DIM_OUTPUT), "bad output shape"
    assert jnp.allclose(out, ref, atol=1e-4, rtol=1e-4), "f32 path mismatch vs reference"

    # Features-major entry point (no wrapper transpose).
    out_t = jax.block_until_ready(pinn_v_forward_t(x.T, params))
    assert out_t.shape == (DIM_OUTPUT, N)
    assert jnp.allclose(out_t, ref.T, atol=1e-4, rtol=1e-4), "features-major path mismatch"

    # bf16-MXU path: relaxed tolerance (reduced-precision matmul by design).
    out_bf16 = jax.block_until_ready(pinn_v_forward(x, params, use_bf16=True))
    assert jnp.allclose(out_bf16, ref, atol=5e-2, rtol=5e-2), "bf16 path mismatch"

    print("KERNEL_OK")
</pallas_src>

<mosaic_0001>
module attributes {stable_mosaic.version = 11 : i64} {
  func.func @kernel(%arg0: i32, %arg1: memref<8x512xf32, #tpu.memory_space<vmem>>, %arg2: memref<4x32x32xf32, #tpu.memory_space<vmem>>, %arg3: memref<4x32x1xf32, #tpu.memory_space<vmem>>, %arg4: memref<8x512xf32, #tpu.memory_space<vmem>>) attributes {dimension_semantics = [#tpu.dimension_semantics<parallel>], iteration_bounds = array<i64: 2>, scalar_prefetch = 0 : i64, scratch_operands = 0 : i64, tpu.core_type = #tpu.core_type<tc>, window_params = [{transform_indices = @transform_0, window_bounds = array<i64: 8, 512>}, {pipeline_mode = #tpu.pipeline_mode<synchronous>, transform_indices = @transform_1, window_bounds = array<i64: 4, 32, 32>}, {pipeline_mode = #tpu.pipeline_mode<synchronous>, transform_indices = @transform_2, window_bounds = array<i64: 4, 32, 1>}, {transform_indices = @transform_3, window_bounds = array<i64: 8, 512>}]} {
    %c0 = arith.constant 0 : index
    %c0_0 = arith.constant 0 : index
    %0 = vector.load %arg1[%c0, %c0_0] : memref<8x512xf32, #tpu.memory_space<vmem>>, vector<8x512xf32>
    %c0_1 = arith.constant 0 : index
    %c0_2 = arith.constant 0 : index
    %c0_3 = arith.constant 0 : index
    %1 = vector.load %arg2[%c0_1, %c0_2, %c0_3] : memref<4x32x32xf32, #tpu.memory_space<vmem>>, vector<1x32x32xf32>
    %2 = vector.shape_cast %1 : vector<1x32x32xf32> to vector<32x32xf32>
    %c0_4 = arith.constant 0 : index
    %c0_5 = arith.constant 0 : index
    %c0_6 = arith.constant 0 : index
    %3 = vector.load %arg3[%c0_4, %c0_5, %c0_6] : memref<4x32x1xf32, #tpu.memory_space<vmem>>, vector<1x32x1xf32>
    %4 = vector.shape_cast %3 : vector<1x32x1xf32> to vector<32x1xf32>
    %5 = vector.extract_strided_slice %2 {offsets = [0, 0], sizes = [32, 8], strides = [1, 1]} : vector<32x32xf32> to vector<32x8xf32>
    %cst = arith.constant dense<0.000000e+00> : vector<32x512xf32>
    %6 = tpu.matmul %5, %0, %cst {dimension_numbers = #tpu.dot_dimension_numbers<[1], [0], [0], [1], [0, 0, 1, 1], [], []>} : vector<32x8xf32>, vector<8x512xf32>, vector<32x512xf32> -> vector<32x512xf32>
    %7 = vector.broadcast %4 : vector<32x1xf32> to vector<32x512xf32>
    %8 = arith.addf %6, %7 : vector<32x512xf32>
    %9 = arith.negf %8 : vector<32x512xf32>
    %10 = math.exp %9 : vector<32x512xf32>
    %cst_7 = arith.constant 1.000000e+00 : f32
    %11 = vector.broadcast %cst_7 : f32 to vector<32x512xf32>
    %12 = arith.addf %11, %10 : vector<32x512xf32>
    %13 = arith.divf %11, %12 : vector<32x512xf32>
    %14 = arith.mulf %8, %13 : vector<32x512xf32>
    %c1 = arith.constant 1 : index
    %c0_8 = arith.constant 0 : index
    %c0_9 = arith.constant 0 : index
    %15 = vector.load %arg2[%c1, %c0_8, %c0_9] : memref<4x32x32xf32, #tpu.memory_space<vmem>>, vector<1x32x32xf32>
    %16 = vector.shape_cast %15 : vector<1x32x32xf32> to vector<32x32xf32>
    %c1_10 = arith.constant 1 : index
    %c0_11 = arith.constant 0 : index
    %c0_12 = arith.constant 0 : index
    %17 = vector.load %arg3[%c1_10, %c0_11, %c0_12] : memref<4x32x1xf32, #tpu.memory_space<vmem>>, vector<1x32x1xf32>
    %18 = vector.shape_cast %17 : vector<1x32x1xf32> to vector<32x1xf32>
    %cst_13 = arith.constant dense<0.000000e+00> : vector<32x512xf32>
    %19 = tpu.matmul %16, %14, %cst_13 {dimension_numbers = #tpu.dot_dimension_numbers<[1], [0], [0], [1], [0, 0, 1, 1], [], []>} : vector<32x32xf32>, vector<32x512xf32>, vector<32x512xf32> -> vector<32x512xf32>
    %20 = vector.broadcast %18 : vector<32x1xf32> to vector<32x512xf32>
    %21 = arith.addf %19, %20 : vector<32x512xf32>
    %22 = arith.negf %21 : vector<32x512xf32>
    %23 = math.exp %22 : vector<32x512xf32>
    %cst_14 = arith.constant 1.000000e+00 : f32
    %24 = vector.broadcast %cst_14 : f32 to vector<32x512xf32>
    %25 = arith.addf %24, %23 : vector<32x512xf32>
    %26 = arith.divf %24, %25 : vector<32x512xf32>
    %27 = arith.mulf %21, %26 : vector<32x512xf32>
    %c2 = arith.constant 2 : index
    %c0_15 = arith.constant 0 : index
    %c0_16 = arith.constant 0 : index
    %28 = vector.load %arg2[%c2, %c0_15, %c0_16] : memref<4x32x32xf32, #tpu.memory_space<vmem>>, vector<1x32x32xf32>
    %29 = vector.shape_cast %28 : vector<1x32x32xf32> to vector<32x32xf32>
    %c2_17 = arith.constant 2 : index
    %c0_18 = arith.constant 0 : index
    %c0_19 = arith.constant 0 : index
    %30 = vector.load %arg3[%c2_17, %c0_18, %c0_19] : memref<4x32x1xf32, #tpu.memory_space<vmem>>, vector<1x32x1xf32>
    %31 = vector.shape_cast %30 : vector<1x32x1xf32> to vector<32x1xf32>
    %cst_20 = arith.constant dense<0.000000e+00> : vector<32x512xf32>
    %32 = tpu.matmul %29, %27, %cst_20 {dimension_numbers = #tpu.dot_dimension_numbers<[1], [0], [0], [1], [0, 0, 1, 1], [], []>} : vector<32x32xf32>, vector<32x512xf32>, vector<32x512xf32> -> vector<32x512xf32>
    %33 = vector.broadcast %31 : vector<32x1xf32> to vector<32x512xf32>
    %34 = arith.addf %32, %33 : vector<32x512xf32>
    %35 = arith.negf %34 : vector<32x512xf32>
    %36 = math.exp %35 : vector<32x512xf32>
    %cst_21 = arith.constant 1.000000e+00 : f32
    %37 = vector.broadcast %cst_21 : f32 to vector<32x512xf32>
    %38 = arith.addf %37, %36 : vector<32x512xf32>
    %39 = arith.divf %37, %38 : vector<32x512xf32>
    %40 = arith.mulf %34, %39 : vector<32x512xf32>
    %c3 = arith.constant 3 : index
    %c0_22 = arith.constant 0 : index
    %c0_23 = arith.constant 0 : index
    %41 = vector.load %arg2[%c3, %c0_22, %c0_23] : memref<4x32x32xf32, #tpu.memory_space<vmem>>, vector<1x32x32xf32>
    %42 = vector.shape_cast %41 : vector<1x32x32xf32> to vector<32x32xf32>
    %c3_24 = arith.constant 3 : index
    %c0_25 = arith.constant 0 : index
    %c0_26 = arith.constant 0 : index
    %43 = vector.load %arg3[%c3_24, %c0_25, %c0_26] : memref<4x32x1xf32, #tpu.memory_space<vmem>>, vector<1x32x1xf32>
    %44 = vector.shape_cast %43 : vector<1x32x1xf32> to vector<32x1xf32>
    %45 = vector.extract_strided_slice %42 {offsets = [0, 0], sizes = [8, 32], strides = [1, 1]} : vector<32x32xf32> to vector<8x32xf32>
    %46 = vector.extract_strided_slice %44 {offsets = [0, 0], sizes = [8, 1], strides = [1, 1]} : vector<32x1xf32> to vector<8x1xf32>
    %cst_27 = arith.constant dense<0.000000e+00> : vector<8x512xf32>
    %47 = tpu.matmul %45, %40, %cst_27 {dimension_numbers = #tpu.dot_dimension_numbers<[1], [0], [0], [1], [0, 0, 1, 1], [], []>} : vector<8x32xf32>, vector<32x512xf32>, vector<8x512xf32> -> vector<8x512xf32>
    %48 = vector.broadcast %46 : vector<8x1xf32> to vector<8x512xf32>
    %49 = arith.addf %47, %48 : vector<8x512xf32>
    %c0_28 = arith.constant 0 : index
    %c0_29 = arith.constant 0 : index
    %50 = vector.load %arg4[%c0_28, %c0_29] : memref<8x512xf32, #tpu.memory_space<vmem>>, vector<8x512xf32>
    tpu.vector_store %arg4[%c0_28, %c0_29], %49 {strides = array<i32>} : memref<8x512xf32, #tpu.memory_space<vmem>>, vector<8x512xf32>,
    return
  }
  func.func @transform_0(%arg0: i32) -> (i32, i32) {
    %c0_i32 = arith.constant 0 : i32
    %c0_i32_0 = arith.constant 0 : i32
    return %c0_i32, %arg0 : i32, i32
  }
  func.func @transform_1(%arg0: i32) -> (i32, i32, i32) {
    %c0_i32 = arith.constant 0 : i32
    %c0_i32_0 = arith.constant 0 : i32
    %c0_i32_1 = arith.constant 0 : i32
    %c0_i32_2 = arith.constant 0 : i32
    return %c0_i32, %c0_i32_0, %c0_i32_1 : i32, i32, i32
  }
  func.func @transform_2(%arg0: i32) -> (i32, i32, i32) {
    %c0_i32 = arith.constant 0 : i32
    %c0_i32_0 = arith.constant 0 : i32
    %c0_i32_1 = arith.constant 0 : i32
    %c0_i32_2 = arith.constant 0 : i32
    return %c0_i32, %c0_i32_0, %c0_i32_1 : i32, i32, i32
  }
  func.func @transform_3(%arg0: i32) -> (i32, i32) {
    %c0_i32 = arith.constant 0 : i32
    %c0_i32_0 = arith.constant 0 : i32
    return %c0_i32, %arg0 : i32, i32
  }
}

</mosaic_0001>

<llo_original>
// kernel: tpu_custom_call.1
$region0: #{tpu_custom_call.1}
  #allocation0 [shape = 'u32[]', space=smem, size = 0x4, offset = 0x4, fixed_abs, tag = 'smem constant byte address 0x4 - core index']
  #allocation1 [shape = 'u32[72,128]{1,0:T(1,128)}', space=vmem, size = 0x9000, scoped, tag = 'internal scratch']
  %s0 = inlined_call_operand.hbm [shape: f32[8,1024], index: 0, kind: input, shape index: {}]
  %s1 = inlined_call_operand.vmem [shape: f32[4,32,32], index: 1, kind: input, shape index: {}]
  %s2 = inlined_call_operand.vmem [shape: f32[4,32,1], index: 2, kind: input, shape index: {}]
  %s3 = inlined_call_operand.hbm [shape: f32[8,1024], index: 3, kind: output, shape index: {}]
  %s4 = sld [smem:[#allocation0]]
  $region49: #{tpu_custom_call.1} parent=0
    _
  %s6 = ssub.s32 1, %s4
  %s7 = scalar_select 0, %s6, %s4
  $region1: #{tpu_custom_call.1} parent=0
    #allocation2 [shape = 'u8[32768]{0}', space=vmem, size = 0x8000, scoped, tag = 'input window, operand 0']
    #allocation3 [shape = 's32[2]{0}', space=sflag, size = 0x8, scoped, tag = 'scoped memory for tpu_custom_call.1']
    #allocation4 [shape = 's32[2]{0}', space=sflag, size = 0x8, scoped, tag = 'scoped memory for tpu_custom_call.1']
    #allocation5 [shape = 'u8[32768]{0}', space=vmem, size = 0x8000, scoped, tag = 'output window, operand 0']
    %8 = vsyncpa [#allocation3], 0
    %s9 = scalar_lea.sflag [#allocation3], 1
    %10 = vsyncpa %s9, 0
    %11 = vsyncpa [#allocation4], 0
    %s12 = scalar_lea.sflag [#allocation4], 1
    %13 = vsyncpa %s12, 0
    loop: start=0, step=1, limit=4
    $region2: #{tpu_custom_call.1} parent=1 // loop_pre_header
      _
    $region3: #{tpu_custom_call.1} parent=1 // loop_header
      %s15 = sphi 0, %s19
      %p16 = scmp.ge.s32.totalorder %s15, 4
      %s25 = sphi 0, %s27
      %s28 = sphi 0, %s25
      %s29 = sphi 0, %s28
      %s45 = sphi 0, %s29
      %s49 = sphi 0, %s49
      %s51 = sphi 0, %s49
      %s52 = sphi 0, %s51
      %s66 = sphi 0, %s52
      %s70 = sphi 0, %s70
      %s72 = sphi 0, %s70
      %s73 = sphi 0, %s72
      %s87 = sphi 0, %s73
      %s93 = sphi 0, %s95
      %s96 = sphi 0, %s93
      %s97 = sphi 0, %s96
      %s113 = sphi 0, %s97
    $region4: #{tpu_custom_call.1} parent=1 // loop_header_branch
      %18 = sbr.rel (%p16) target = $region8
    $region5: #{tpu_custom_call.1} parent=1 // loop_body
      %s20 = ssub.s32 %s15, 1
      %s21 = ssub.s32 %s15, 2
      %s22 = sadd.s32 %s15, 1
      %s23 = ssub.s32 %s15, %s22
      %p24 = scmp.eq.s32.totalorder %s23, 0
      %s26 = sadd.s32 %s25, 1
      %s27 = scalar_select %p24, %s25, %s26
      %p30 = pneg %p24
      %p31 = scmp.eq.s32.totalorder %s15, 1
      %p32 = por %p30, %p31
      %p33 = scmp.ne.s32.totalorder %s25, %s28
      %p34 = scmp.eq.s32.totalorder %s15, 0
      %p35 = por %p33, %p34
      %p36 = scmp.ne.s32.totalorder %s25, %s28
      %p37 = scmp.eq.s32.totalorder %s20, 1
      %p38 = por %p36, %p37
      %p39 = scmp.ne.s32.totalorder %s28, %s29
      %p40 = scmp.eq.s32.totalorder %s20, 0
      %p41 = por %p39, %p40
      %p42 = scmp.ne.s32.totalorder %s28, %s29
      %p43 = scmp.eq.s32.totalorder %s21, 1
      %p44 = por %p42, %p43
      %p46 = scmp.ne.s32.totalorder %s29, %s45
      %p47 = scmp.eq.s32.totalorder %s21, 0
      %p48 = por %p46, %p47
      %s50 = sadd.s32 %s49, 1
      %p53 = scmp.eq.s32.totalorder %s15, 1
      %p54 = scmp.ne.s32.totalorder %s49, %s51
      %p55 = scmp.eq.s32.totalorder %s15, 0
      %p56 = por %p54, %p55
      %p57 = scmp.ne.s32.totalorder %s49, %s51
      %p58 = scmp.eq.s32.totalorder %s20, 1
      %p59 = por %p57, %p58
      %p60 = scmp.ne.s32.totalorder %s51, %s52
      %p61 = scmp.eq.s32.totalorder %s20, 0
      %p62 = por %p60, %p61
      %p63 = scmp.ne.s32.totalorder %s51, %s52
      %p64 = scmp.eq.s32.totalorder %s21, 1
      %p65 = por %p63, %p64
      %p67 = scmp.ne.s32.totalorder %s52, %s66
      %p68 = scmp.eq.s32.totalorder %s21, 0
      %p69 = por %p67, %p68
      %s71 = sadd.s32 %s70, 1
      %p74 = scmp.eq.s32.totalorder %s15, 1
      %p75 = scmp.ne.s32.totalorder %s70, %s72
      %p76 = scmp.eq.s32.totalorder %s15, 0
      %p77 = por %p75, %p76
      %p78 = scmp.ne.s32.totalorder %s70, %s72
      %p79 = scmp.eq.s32.totalorder %s20, 1
      %p80 = por %p78, %p79
      %p81 = scmp.ne.s32.totalorder %s72, %s73
      %p82 = scmp.eq.s32.totalorder %s20, 0
      %p83 = por %p81, %p82
      %p84 = scmp.ne.s32.totalorder %s72, %s73
      %p85 = scmp.eq.s32.totalorder %s21, 1
      %p86 = por %p84, %p85
      %p88 = scmp.ne.s32.totalorder %s73, %s87
      %p89 = scmp.eq.s32.totalorder %s21, 0
      %p90 = por %p88, %p89
      %s91 = ssub.s32 %s15, %s22
      %p92 = scmp.eq.s32.totalorder %s91, 0
      %s94 = sadd.s32 %s93, 1
      %s95 = scalar_select %p92, %s93, %s94
      %p98 = pneg %p92
      %p99 = scmp.eq.s32.totalorder %s15, 1
      %p100 = por %p98, %p99
      %p101 = scmp.ne.s32.totalorder %s93, %s96
      %p102 = scmp.eq.s32.totalorder %s15, 0
      %p103 = por %p101, %p102
      %p104 = scmp.ne.s32.totalorder %s93, %s96
      %p105 = scmp.eq.s32.totalorder %s20, 1
      %p106 = por %p104, %p105
      %p107 = scmp.ne.s32.totalorder %s96, %s97
      %p108 = scmp.eq.s32.totalorder %s20, 0
      %p109 = por %p107, %p108
      %p110 = scmp.ne.s32.totalorder %s96, %s97
      %p111 = scmp.eq.s32.totalorder %s21, 1
      %p112 = por %p110, %p111
      %p114 = scmp.ne.s32.totalorder %s97, %s113
      %p115 = scmp.eq.s32.totalorder %s21, 0
      %p116 = por %p114, %p115
      %p117 = scmp.le.s32.totalorder 1, %s15
      %p118 = scmp.lt.s32.totalorder %s15, 3
      %p119 = pnand %p117, %p118
      %p120 = pneg %p119
      // Predicated region
      $region9: #{tpu_custom_call.1} parent=5 // pred_check
        _
      $region10: #{tpu_custom_call.1} parent=5 // pred_check_branch
        %122 = sbr.rel (%p119) target = $region12
      $region11: #{tpu_custom_call.1} parent=5 // pred_region
        %s123 = ssub.s32 %s15, 1
        // Predicated region
        $region13: #{tpu_custom_call.1} parent=11 // pred_check
          %p124 = pneg %p62
        $region14: #{tpu_custom_call.1} parent=11 // pred_check_branch
          %126 = sbr.rel (%p124) target = $region16
        $region15: #{tpu_custom_call.1} parent=11 // pred_region
          _
        $region16: #{tpu_custom_call.1} parent=11 // pred_fallthru
          _
        // Predicated region
        $region17: #{tpu_custom_call.1} parent=11 // pred_check
          %p127 = pneg %p83
        $region18: #{tpu_custom_call.1} parent=11 // pred_check_branch
          %129 = sbr.rel (%p127) target = $region20
        $region19: #{tpu_custom_call.1} parent=11 // pred_region
          _
        $region20: #{tpu_custom_call.1} parent=11 // pred_fallthru
          _
      $region12: #{tpu_custom_call.1} parent=5 // pred_fallthru
        _
      %p130 = scmp.lt.s32.totalorder %s15, 2
      // Predicated region
      $region21: #{tpu_custom_call.1} parent=5 // pred_check
        %p131 = pneg %p130
      $region22: #{tpu_custom_call.1} parent=5 // pred_check_branch
        %133 = sbr.rel (%p131) target = $region24
      $region23: #{tpu_custom_call.1} parent=5 // pred_region
        // Predicated region
        $region25: #{tpu_custom_call.1} parent=23 // pred_check
          %p134 = pneg %p35
        $region26: #{tpu_custom_call.1} parent=23 // pred_check_branch
          %136 = sbr.rel (%p134) target = $region28
        $region27: #{tpu_custom_call.1} parent=23 // pred_region
          %s137 = sand.u32 %s25, 1
          %s138 = scalar_lea.sflag [#allocation3], %s137
          %s139 = sand.u32 %s25, 1
          %s140 = smul.addr %s139, 32
          %s141 = scalar_lea.vmem [#allocation2], %s140
          %s142 = smul.u32 4, %s15
          %144 = vsyncadd %s138, 0
          %s145 = smul.addr %s142, 8
          %s146 = scalar_lea.hbm %s0, %s145
          %s148 = sshll.u32 %s146, 4
          %s149 = int_to_ptr.hbm [resolvable:$true] %s148
          %s150 = sshll.u32 %s141, 4
          %s151 = int_to_ptr.vmem [resolvable:$true] %s150
          %153 = dma.hbm_to_vmem [thread:$0]  %s149, 512, %s151, %s138
        $region28: #{tpu_custom_call.1} parent=23 // pred_fallthru
          _
      $region24: #{tpu_custom_call.1} parent=5 // pred_fallthru
        _
      %p154 = scmp.le.s32.totalorder 1, %s15
      %p155 = scmp.lt.s32.totalorder %s15, 3
      %p156 = pnand %p154, %p155
      %p157 = pneg %p156
      // Predicated region
      $region29: #{tpu_custom_call.1} parent=5 // pred_check
        _
      $region30: #{tpu_custom_call.1} parent=5 // pred_check_branch
        %159 = sbr.rel (%p156) target = $region32
      $region31: #{tpu_custom_call.1} parent=5 // pred_region
        %s160 = ssub.s32 %s15, 1
        %s161 = sand.u32 %s28, 1
        %s162 = scalar_lea.sflag [#allocation3], %s161
        %s163 = sand.u32 %s28, 1
        %s164 = smul.addr %s163, 32
        %s165 = scalar_lea.vmem [#allocation2], %s164
        // Predicated region
        $region33: #{tpu_custom_call.1} parent=31 // pred_check
          %p166 = pneg %p41
        $region34: #{tpu_custom_call.1} parent=31 // pred_check_branch
          %168 = sbr.rel (%p166) target = $region36
        $region35: #{tpu_custom_call.1} parent=31 // pred_region
          %170 = dma.done %s162, 512
        $region36: #{tpu_custom_call.1} parent=31 // pred_fallthru
          _
        %s171 = sand.u32 %s28, 1
        %s172 = scalar_lea.sflag [#allocation3], %s171
        %s173 = sand.u32 %s28, 1
        %s174 = smul.addr %s173, 32
        %s175 = scalar_lea.vmem [#allocation2], %s174
        %p176 = pneg %p41
        %p177 = pneg %p38
        %p178 = pneg %p62
        %p179 = pneg %p59
        %p180 = pneg %p83
        %p181 = pneg %p80
        %p182 = pneg %p109
        %p183 = pneg %p106
        %s184 = sand.u32 %s96, 1
        %s185 = scalar_lea.sflag [#allocation4], %s184
        %s186 = sand.u32 %s96, 1
        %s187 = smul.addr %s186, 32
        %s188 = scalar_lea.vmem [#allocation5], %s187
        %s189 = smul.u32 4, %s20
        %s190 = smul.u32 4, %s20
        %v191 = vld [vmem:[%s165] sm:$0xff]
        %v192 = vld [vmem:[%s165 + $0x8] sm:$0xff]
        %v193 = vld [vmem:[%s165 + $0x10] sm:$0xff]
        %v194 = vld [vmem:[%s165 + $0x18] sm:$0xff]
        %v195 = vld [vmem:[%s1] sm:$0xff]
        %v196 = vld [vmem:[%s1 + $0x8] sm:$0xff]
        %v197 = vld [vmem:[%s1 + $0x10] sm:$0xff]
        %v198 = vld [vmem:[%s1 + $0x18] sm:$0xff]
        %v199 = vld [vmem:[%s2] sm:$0xff]
        %v200 = vld [vmem:[%s2 + $0x8] sm:$0xff]
        %v201 = vld [vmem:[%s2 + $0x10] sm:$0xff]
        %v202 = vld [vmem:[%s2 + $0x18] sm:$0xff]
        %204 = vset.pattern.permute.xlu0 0
        %205 = vperm.xlu0 %204, %v199
        %v206 = vpop.permute.xlu0 %205
        %209 = vset.pattern.permute.xlu0 0
        %210 = vperm.xlu0 %209, %v200
        %v211 = vpop.permute.xlu0 %210
        %214 = vset.pattern.permute.xlu0 0
        %215 = vperm.xlu0 %214, %v201
        %v216 = vpop.permute.xlu0 %215
        %219 = vset.pattern.permute.xlu0 0
        %220 = vperm.xlu0 %219, %v202
        %v221 = vpop.permute.xlu0 %220
        %vm223 = vcmask 64512
        %v225 = vsel %vm223, %v195, 0
        %v228 = vsel %vm223, %v196, 0
        %v231 = vsel %vm223, %v197, 0
        %v234 = vsel %vm223, %v198, 0
        %236 = vmatpush.msra.mxu0 0.0
        %237 = vmatpush.msra.mxu0 0.0
        %238 = vmatpush.msra.mxu0 0.0
        %239 = vmatpush.msra.mxu0 0.0
        %240 = vmatpush.msra.mxu0 0.0
        %241 = vmatpush.msra.mxu0 0.0
        %242 = vmatpush.msra.mxu0 0.0
        %243 = vmatpush.msra.mxu0 0.0
        %244 = vmatpush.msra.mxu0 0.0
        %245 = vmatpush.msra.mxu0 0.0
        %246 = vmatpush.msra.mxu0 0.0
        %247 = vmatpush.msra.mxu0 0.0
        %248 = vmatpush.msra.mxu0 0.0
        %249 = vmatpush.msra.mxu0 0.0
        %250 = vmatpush.msra.mxu0 0.0
        %251 = vmatpush.msra.mxu0 %v191
        %252 = vmatmul.f32.gmra.mxu0 %v225
        %v253 = vpop.f32.mrf.mxu0
        %v254 = vadd.f32 %v206, %v253
        %255 = vmatmul.f32.gmra.mxu0 %v228
        %v256 = vpop.f32.mrf.mxu0
        %v257 = vadd.f32 %v211, %v256
        %258 = vmatmul.f32.gmra.mxu0 %v231
        %v259 = vpop.f32.mrf.mxu0
        %v260 = vadd.f32 %v216, %v259
        %261 = vmatmul.f32.gmra.mxu0 %v234
        %v262 = vpop.f32.mrf.mxu0
        %v263 = vadd.f32 %v221, %v262
        %264 = vdwg.mxu0
        %265 = vmatpush.msra.mxu0 0.0
        %266 = vmatpush.msra.mxu0 0.0
        %267 = vmatpush.msra.mxu0 0.0
        %268 = vmatpush.msra.mxu0 0.0
        %269 = vmatpush.msra.mxu0 0.0
        %270 = vmatpush.msra.mxu0 0.0
        %271 = vmatpush.msra.mxu0 0.0
        %272 = vmatpush.msra.mxu0 0.0
        %273 = vmatpush.msra.mxu0 0.0
        %274 = vmatpush.msra.mxu0 0.0
        %275 = vmatpush.msra.mxu0 0.0
        %276 = vmatpush.msra.mxu0 0.0
        %277 = vmatpush.msra.mxu0 0.0
        %278 = vmatpush.msra.mxu0 0.0
        %279 = vmatpush.msra.mxu0 0.0
        %280 = vmatpush.msra.mxu0 %v192
        %281 = vmatmul.f32.gmra.mxu0 %v225
        %v282 = vpop.f32.mrf.mxu0
        %v283 = vadd.f32 %v206, %v282
        %284 = vmatmul.f32.gmra.mxu0 %v228
        %v285 = vpop.f32.mrf.mxu0
        %v286 = vadd.f32 %v211, %v285
        %287 = vmatmul.f32.gmra.mxu0 %v231
        %v288 = vpop.f32.mrf.mxu0
        %v289 = vadd.f32 %v216, %v288
        %290 = vmatmul.f32.gmra.mxu0 %v234
        %v291 = vpop.f32.mrf.mxu0
        %v292 = vadd.f32 %v221, %v291
        %293 = vdwg.mxu0
        %294 = vmatpush.msra.mxu0 0.0
        %295 = vmatpush.msra.mxu0 0.0
        %296 = vmatpush.msra.mxu0 0.0
        %297 = vmatpush.msra.mxu0 0.0
        %298 = vmatpush.msra.mxu0 0.0
        %299 = vmatpush.msra.mxu0 0.0
        %300 = vmatpush.msra.mxu0 0.0
        %301 = vmatpush.msra.mxu0 0.0
        %302 = vmatpush.msra.mxu0 0.0
        %303 = vmatpush.msra.mxu0 0.0
        %304 = vmatpush.msra.mxu0 0.0
        %305 = vmatpush.msra.mxu0 0.0
        %306 = vmatpush.msra.mxu0 0.0
        %307 = vmatpush.msra.mxu0 0.0
        %308 = vmatpush.msra.mxu0 0.0
        %309 = vmatpush.msra.mxu0 %v193
        %310 = vmatmul.f32.gmra.mxu0 %v225
        %v311 = vpop.f32.mrf.mxu0
        %v312 = vadd.f32 %v206, %v311
        %313 = vmatmul.f32.gmra.mxu0 %v228
        %v314 = vpop.f32.mrf.mxu0
        %v315 = vadd.f32 %v211, %v314
        %316 = vmatmul.f32.gmra.mxu0 %v231
        %v317 = vpop.f32.mrf.mxu0
        %v318 = vadd.f32 %v216, %v317
        %319 = vmatmul.f32.gmra.mxu0 %v234
        %v320 = vpop.f32.mrf.mxu0
        %v321 = vadd.f32 %v221, %v320
        %322 = vdwg.mxu0
        %323 = vmatpush.msra.mxu0 0.0
        %324 = vmatpush.msra.mxu0 0.0
        %325 = vmatpush.msra.mxu0 0.0
        %326 = vmatpush.msra.mxu0 0.0
        %327 = vmatpush.msra.mxu0 0.0
        %328 = vmatpush.msra.mxu0 0.0
        %329 = vmatpush.msra.mxu0 0.0
        %330 = vmatpush.msra.mxu0 0.0
        %331 = vmatpush.msra.mxu0 0.0
        %332 = vmatpush.msra.mxu0 0.0
        %333 = vmatpush.msra.mxu0 0.0
        %334 = vmatpush.msra.mxu0 0.0
        %335 = vmatpush.msra.mxu0 0.0
        %336 = vmatpush.msra.mxu0 0.0
        %337 = vmatpush.msra.mxu0 0.0
        %338 = vmatpush.msra.mxu0 %v194
        %339 = vmatmul.f32.gmra.mxu0 %v225
        %v340 = vpop.f32.mrf.mxu0
        %v341 = vadd.f32 %v206, %v340
        %342 = vmatmul.f32.gmra.mxu0 %v228
        %v343 = vpop.f32.mrf.mxu0
        %v344 = vadd.f32 %v211, %v343
        %345 = vmatmul.f32.gmra.mxu0 %v231
        %v346 = vpop.f32.mrf.mxu0
        %v347 = vadd.f32 %v216, %v346
        %348 = vmatmul.f32.gmra.mxu0 %v234
        %v349 = vpop.f32.mrf.mxu0
        %v350 = vadd.f32 %v221, %v349
        %351 = vdwg.mxu0
        %v352 = vxor.u32 %v254, 2147483648
        %v353 = vxor.u32 %v283, 2147483648
        %v354 = vxor.u32 %v312, 2147483648
        %v355 = vxor.u32 %v341, 2147483648
        %v356 = vxor.u32 %v257, 2147483648
        %v357 = vxor.u32 %v286, 2147483648
        %v358 = vxor.u32 %v315, 2147483648
        %v359 = vxor.u32 %v344, 2147483648
        %v360 = vxor.u32 %v260, 2147483648
        %v361 = vxor.u32 %v289, 2147483648
        %v362 = vxor.u32 %v318, 2147483648
        %v363 = vxor.u32 %v347, 2147483648
        %v364 = vxor.u32 %v263, 2147483648
        %v365 = vxor.u32 %v292, 2147483648
        %v366 = vxor.u32 %v321, 2147483648
        %v367 = vxor.u32 %v350, 2147483648
        %v368 = vmul.f32 %v352, 1.442695
        %v369 = vpow.pop %v368
        %v370 = vmul.f32 %v353, 1.442695
        %v371 = vpow.pop %v370
        %v372 = vmul.f32 %v354, 1.442695
        %v373 = vpow.pop %v372
        %v374 = vmul.f32 %v355, 1.442695
        %v375 = vpow.pop %v374
        %v376 = vmul.f32 %v356, 1.442695
        %v377 = vpow.pop %v376
        %v378 = vmul.f32 %v357, 1.442695
        %v379 = vpow.pop %v378
        %v380 = vmul.f32 %v358, 1.442695
        %v381 = vpow.pop %v380
        %v382 = vmul.f32 %v359, 1.442695
        %v383 = vpow.pop %v382
        %v384 = vmul.f32 %v360, 1.442695
        %v385 = vpow.pop %v384
        %v386 = vmul.f32 %v361, 1.442695
        %v387 = vpow.pop %v386
        %v388 = vmul.f32 %v362, 1.442695
        %v389 = vpow.pop %v388
        %v390 = vmul.f32 %v363, 1.442695
        %v391 = vpow.pop %v390
        %v392 = vmul.f32 %v364, 1.442695
        %v393 = vpow.pop %v392
        %v394 = vmul.f32 %v365, 1.442695
        %v395 = vpow.pop %v394
        %v396 = vmul.f32 %v366, 1.442695
        %v397 = vpow.pop %v396
        %v398 = vmul.f32 %v367, 1.442695
        %v399 = vpow.pop %v398
        %v400 = vadd.f32 %v369, 1.0
        %v401 = vadd.f32 %v371, 1.0
        %v402 = vadd.f32 %v373, 1.0
        %v403 = vadd.f32 %v375, 1.0
        %v404 = vadd.f32 %v377, 1.0
        %v405 = vadd.f32 %v379, 1.0
        %v406 = vadd.f32 %v381, 1.0
        %v407 = vadd.f32 %v383, 1.0
        %v408 = vadd.f32 %v385, 1.0
        %v409 = vadd.f32 %v387, 1.0
        %v410 = vadd.f32 %v389, 1.0
        %v411 = vadd.f32 %v391, 1.0
        %v412 = vadd.f32 %v393, 1.0
        %v413 = vadd.f32 %v395, 1.0
        %v414 = vadd.f32 %v397, 1.0
        %v415 = vadd.f32 %v399, 1.0
        %v416 = vrcp.pop %v400
        %v417 = vmul.f32 %v400, %v416
        %v418 = vsub.f32 1.0, %v417
        %v419 = vmul.f32 %v416, %v418
        %v420 = vadd.f32 %v416, %v419
        %vm421 = vweird.f32 %v400
        %vm422 = vweird.f32 %v416
        %vm423 = vmor %vm421, %vm422
        %v424 = vsel %vm423, %v416, %v420
        %v425 = vand.u32 2147483647, %v400
        %vm426 = vcmp.eq.f32.partialorder %v425, 8.507059e+37
        %v427 = vand.u32 %v400, 2147483648
        %v428 = vor.u32 1.1754944e-38, %v427
        %v429 = vsel %vm426, %v428, %v424
        %v430 = vmul.f32 1.0, %v429
        %v431 = vrcp.pop %v401
        %v432 = vmul.f32 %v401, %v431
        %v433 = vsub.f32 1.0, %v432
        %v434 = vmul.f32 %v431, %v433
        %v435 = vadd.f32 %v431, %v434
        %vm436 = vweird.f32 %v401
        %vm437 = vweird.f32 %v431
        %vm438 = vmor %vm436, %vm437
        %v439 = vsel %vm438, %v431, %v435
        %v440 = vand.u32 2147483647, %v401
        %vm441 = vcmp.eq.f32.partialorder %v440, 8.507059e+37
        %v442 = vand.u32 %v401, 2147483648
        %v443 = vor.u32 1.1754944e-38, %v442
        %v444 = vsel %vm441, %v443, %v439
        %v445 = vmul.f32 1.0, %v444
        %v446 = vrcp.pop %v402
        %v447 = vmul.f32 %v402, %v446
        %v448 = vsub.f32 1.0, %v447
        %v449 = vmul.f32 %v446, %v448
        %v450 = vadd.f32 %v446, %v449
        %vm451 = vweird.f32 %v402
        %vm452 = vweird.f32 %v446
        %vm453 = vmor %vm451, %vm452
        %v454 = vsel %vm453, %v446, %v450
        %v455 = vand.u32 2147483647, %v402
        %vm456 = vcmp.eq.f32.partialorder %v455, 8.507059e+37
        %v457 = vand.u32 %v402, 2147483648
        %v458 = vor.u32 1.1754944e-38, %v457
        %v459 = vsel %vm456, %v458, %v454
        %v460 = vmul.f32 1.0, %v459
        %v461 = vrcp.pop %v403
        %v462 = vmul.f32 %v403, %v461
        %v463 = vsub.f32 1.0, %v462
        %v464 = vmul.f32 %v461, %v463
        %v465 = vadd.f32 %v461, %v464
        %vm466 = vweird.f32 %v403
        %vm467 = vweird.f32 %v461
        %vm468 = vmor %vm466, %vm467
        %v469 = vsel %vm468, %v461, %v465
        %v470 = vand.u32 2147483647, %v403
        %vm471 = vcmp.eq.f32.partialorder %v470, 8.507059e+37
        %v472 = vand.u32 %v403, 2147483648
        %v473 = vor.u32 1.1754944e-38, %v472
        %v474 = vsel %vm471, %v473, %v469
        %v475 = vmul.f32 1.0, %v474
        %v476 = vrcp.pop %v404
        %v477 = vmul.f32 %v404, %v476
        %v478 = vsub.f32 1.0, %v477
        %v479 = vmul.f32 %v476, %v478
        %v480 = vadd.f32 %v476, %v479
        %vm481 = vweird.f32 %v404
        %vm482 = vweird.f32 %v476
        %vm483 = vmor %vm481, %vm482
        %v484 = vsel %vm483, %v476, %v480
        %v485 = vand.u32 2147483647, %v404
        %vm486 = vcmp.eq.f32.partialorder %v485, 8.507059e+37
        %v487 = vand.u32 %v404, 2147483648
        %v488 = vor.u32 1.1754944e-38, %v487
        %v489 = vsel %vm486, %v488, %v484
        %v490 = vmul.f32 1.0, %v489
        %v491 = vrcp.pop %v405
        %v492 = vmul.f32 %v405, %v491
        %v493 = vsub.f32 1.0, %v492
        %v494 = vmul.f32 %v491, %v493
        %v495 = vadd.f32 %v491, %v494
        %vm496 = vweird.f32 %v405
        %vm497 = vweird.f32 %v491
        %vm498 = vmor %vm496, %vm497
        %v499 = vsel %vm498, %v491, %v495
        %v500 = vand.u32 2147483647, %v405
        %vm501 = vcmp.eq.f32.partialorder %v500, 8.507059e+37
        %v502 = vand.u32 %v405, 2147483648
        %v503 = vor.u32 1.1754944e-38, %v502
        %v504 = vsel %vm501, %v503, %v499
        %v505 = vmul.f32 1.0, %v504
        %v506 = vrcp.pop %v406
        %v507 = vmul.f32 %v406, %v506
        %v508 = vsub.f32 1.0, %v507
        %v509 = vmul.f32 %v506, %v508
        %v510 = vadd.f32 %v506, %v509
        %vm511 = vweird.f32 %v406
        %vm512 = vweird.f32 %v506
        %vm513 = vmor %vm511, %vm512
        %v514 = vsel %vm513, %v506, %v510
        %v515 = vand.u32 2147483647, %v406
        %vm516 = vcmp.eq.f32.partialorder %v515, 8.507059e+37
        %v517 = vand.u32 %v406, 2147483648
        %v518 = vor.u32 1.1754944e-38, %v517
        %v519 = vsel %vm516, %v518, %v514
        %v520 = vmul.f32 1.0, %v519
        %v521 = vrcp.pop %v407
        %v522 = vmul.f32 %v407, %v521
        %v523 = vsub.f32 1.0, %v522
        %v524 = vmul.f32 %v521, %v523
        %v525 = vadd.f32 %v521, %v524
        %vm526 = vweird.f32 %v407
        %vm527 = vweird.f32 %v521
        %vm528 = vmor %vm526, %vm527
        %v529 = vsel %vm528, %v521, %v525
        %v530 = vand.u32 2147483647, %v407
        %vm531 = vcmp.eq.f32.partialorder %v530, 8.507059e+37
        %v532 = vand.u32 %v407, 2147483648
        %v533 = vor.u32 1.1754944e-38, %v532
        %v534 = vsel %vm531, %v533, %v529
        %v535 = vmul.f32 1.0, %v534
        %v536 = vrcp.pop %v408
        %v537 = vmul.f32 %v408, %v536
        %v538 = vsub.f32 1.0, %v537
        %v539 = vmul.f32 %v536, %v538
        %v540 = vadd.f32 %v536, %v539
        %vm541 = vweird.f32 %v408
        %vm542 = vweird.f32 %v536
        %vm543 = vmor %vm541, %vm542
        %v544 = vsel %vm543, %v536, %v540
        %v545 = vand.u32 2147483647, %v408
        %vm546 = vcmp.eq.f32.partialorder %v545, 8.507059e+37
        %v547 = vand.u32 %v408, 2147483648
        %v548 = vor.u32 1.1754944e-38, %v547
        %v549 = vsel %vm546, %v548, %v544
        %v550 = vmul.f32 1.0, %v549
        %v551 = vrcp.pop %v409
        %v552 = vmul.f32 %v409, %v551
        %v553 = vsub.f32 1.0, %v552
        %v554 = vmul.f32 %v551, %v553
        %v555 = vadd.f32 %v551, %v554
        %vm556 = vweird.f32 %v409
        %vm557 = vweird.f32 %v551
        %vm558 = vmor %vm556, %vm557
        %v559 = vsel %vm558, %v551, %v555
        %v560 = vand.u32 2147483647, %v409
        %vm561 = vcmp.eq.f32.partialorder %v560, 8.507059e+37
        %v562 = vand.u32 %v409, 2147483648
        %v563 = vor.u32 1.1754944e-38, %v562
        %v564 = vsel %vm561, %v563, %v559
        %v565 = vmul.f32 1.0, %v564
        %v566 = vrcp.pop %v410
        %v567 = vmul.f32 %v410, %v566
        %v568 = vsub.f32 1.0, %v567
        %v569 = vmul.f32 %v566, %v568
        %v570 = vadd.f32 %v566, %v569
        %vm571 = vweird.f32 %v410
        %vm572 = vweird.f32 %v566
        %vm573 = vmor %vm571, %vm572
        %v574 = vsel %vm573, %v566, %v570
        %v575 = vand.u32 2147483647, %v410
        %vm576 = vcmp.eq.f32.partialorder %v575, 8.507059e+37
        %v577 = vand.u32 %v410, 2147483648
        %v578 = vor.u32 1.1754944e-38, %v577
        %v579 = vsel %vm576, %v578, %v574
        %v580 = vmul.f32 1.0, %v579
        %v581 = vrcp.pop %v411
        %v582 = vmul.f32 %v411, %v581
        %v583 = vsub.f32 1.0, %v582
        %v584 = vmul.f32 %v581, %v583
        %v585 = vadd.f32 %v581, %v584
        %vm586 = vweird.f32 %v411
        %vm587 = vweird.f32 %v581
        %vm588 = vmor %vm586, %vm587
        %v589 = vsel %vm588, %v581, %v585
        %v590 = vand.u32 2147483647, %v411
        %vm591 = vcmp.eq.f32.partialorder %v590, 8.507059e+37
        %v592 = vand.u32 %v411, 2147483648
        %v593 = vor.u32 1.1754944e-38, %v592
        %v594 = vsel %vm591, %v593, %v589
        %v595 = vmul.f32 1.0, %v594
        %v596 = vrcp.pop %v412
        %v597 = vmul.f32 %v412, %v596
        %v598 = vsub.f32 1.0, %v597
        %v599 = vmul.f32 %v596, %v598
        %v600 = vadd.f32 %v596, %v599
        %vm601 = vweird.f32 %v412
        %vm602 = vweird.f32 %v596
        %vm603 = vmor %vm601, %vm602
        %v604 = vsel %vm603, %v596, %v600
        %v605 = vand.u32 2147483647, %v412
        %vm606 = vcmp.eq.f32.partialorder %v605, 8.507059e+37
        %v607 = vand.u32 %v412, 2147483648
        %v608 = vor.u32 1.1754944e-38, %v607
        %v609 = vsel %vm606, %v608, %v604
        %v610 = vmul.f32 1.0, %v609
        %v611 = vrcp.pop %v413
        %v612 = vmul.f32 %v413, %v611
        %v613 = vsub.f32 1.0, %v612
        %v614 = vmul.f32 %v611, %v613
        %v615 = vadd.f32 %v611, %v614
        %vm616 = vweird.f32 %v413
        %vm617 = vweird.f32 %v611
        %vm618 = vmor %vm616, %vm617
        %v619 = vsel %vm618, %v611, %v615
        %v620 = vand.u32 2147483647, %v413
        %vm621 = vcmp.eq.f32.partialorder %v620, 8.507059e+37
        %v622 = vand.u32 %v413, 2147483648
        %v623 = vor.u32 1.1754944e-38, %v622
        %v624 = vsel %vm621, %v623, %v619
        %v625 = vmul.f32 1.0, %v624
        %v626 = vrcp.pop %v414
        %v627 = vmul.f32 %v414, %v626
        %v628 = vsub.f32 1.0, %v627
        %v629 = vmul.f32 %v626, %v628
        %v630 = vadd.f32 %v626, %v629
        %vm631 = vweird.f32 %v414
        %vm632 = vweird.f32 %v626
        %vm633 = vmor %vm631, %vm632
        %v634 = vsel %vm633, %v626, %v630
        %v635 = vand.u32 2147483647, %v414
        %vm636 = vcmp.eq.f32.partialorder %v635, 8.507059e+37
        %v637 = vand.u32 %v414, 2147483648
        %v638 = vor.u32 1.1754944e-38, %v637
        %v639 = vsel %vm636, %v638, %v634
        %v640 = vmul.f32 1.0, %v639
        %v641 = vrcp.pop %v415
        %v642 = vmul.f32 %v415, %v641
        %v643 = vsub.f32 1.0, %v642
        %v644 = vmul.f32 %v641, %v643
        %v645 = vadd.f32 %v641, %v644
        %vm646 = vweird.f32 %v415
        %vm647 = vweird.f32 %v641
        %vm648 = vmor %vm646, %vm647
        %v649 = vsel %vm648, %v641, %v645
        %v650 = vand.u32 2147483647, %v415
        %vm651 = vcmp.eq.f32.partialorder %v650, 8.507059e+37
        %v652 = vand.u32 %v415, 2147483648
        %v653 = vor.u32 1.1754944e-38, %v652
        %v654 = vsel %vm651, %v653, %v649
        %v655 = vmul.f32 1.0, %v654
        %v656 = vmul.f32 %v254, %v430
        %v657 = vmul.f32 %v283, %v445
        %v658 = vmul.f32 %v312, %v460
        %v659 = vmul.f32 %v341, %v475
        %v660 = vmul.f32 %v257, %v490
        %v661 = vmul.f32 %v286, %v505
        %v662 = vmul.f32 %v315, %v520
        %v663 = vmul.f32 %v344, %v535
        %v664 = vmul.f32 %v260, %v550
        %v665 = vmul.f32 %v289, %v565
        %v666 = vmul.f32 %v318, %v580
        %v667 = vmul.f32 %v347, %v595
        %v668 = vmul.f32 %v263, %v610
        %v669 = vmul.f32 %v292, %v625
        %v670 = vmul.f32 %v321, %v640
        %v671 = vmul.f32 %v350, %v655
        %s672 = scalar_lea.vmem %s1, 32
        %v673 = vld [vmem:[%s672] sm:$0xff]
        %v674 = vld [vmem:[%s672 + $0x8] sm:$0xff]
        %v675 = vld [vmem:[%s672 + $0x10] sm:$0xff]
        %v676 = vld [vmem:[%s672 + $0x18] sm:$0xff]
        %s677 = scalar_lea.vmem %s2, 32
        %v678 = vld [vmem:[%s677] sm:$0xff]
        %v679 = vld [vmem:[%s677 + $0x8] sm:$0xff]
        %v680 = vld [vmem:[%s677 + $0x10] sm:$0xff]
        %v681 = vld [vmem:[%s677 + $0x18] sm:$0xff]
        %683 = vset.pattern.permute.xlu0 0
        %684 = vperm.xlu0 %683, %v678
        %v685 = vpop.permute.xlu0 %684
        %688 = vset.pattern.permute.xlu0 0
        %689 = vperm.xlu0 %688, %v679
        %v690 = vpop.permute.xlu0 %689
        %693 = vset.pattern.permute.xlu0 0
        %694 = vperm.xlu0 %693, %v680
        %v695 = vpop.permute.xlu0 %694
        %698 = vset.pattern.permute.xlu0 0
        %699 = vperm.xlu0 %698, %v681
        %v700 = vpop.permute.xlu0 %699
        %vm702 = vcmask 261120
        %v704 = vsel %vm702, %v673, 0
        %v707 = vsel %vm702, %v674, 0
        %v710 = vsel %vm702, %v675, 0
        %v713 = vsel %vm702, %v676, 0
        %715 = vmatpush.msra.mxu0 0.0
        %716 = vmatpush.msra.mxu0 0.0
        %717 = vmatpush.msra.mxu0 0.0
        %718 = vmatpush.msra.mxu0 0.0
        %719 = vmatpush.msra.mxu0 0.0
        %720 = vmatpush.msra.mxu0 0.0
        %721 = vmatpush.msra.mxu0 0.0
        %722 = vmatpush.msra.mxu0 0.0
        %723 = vmatpush.msra.mxu0 0.0
        %724 = vmatpush.msra.mxu0 0.0
        %725 = vmatpush.msra.mxu0 0.0
        %726 = vmatpush.msra.mxu0 0.0
        %727 = vmatpush.msra.mxu0 %v668
        %728 = vmatpush.msra.mxu0 %v664
        %729 = vmatpush.msra.mxu0 %v660
        %730 = vmatpush.msra.mxu0 %v656
        %731 = vmatmul.f32.gmra.mxu0 %v704
        %v732 = vpop.f32.mrf.mxu0
        %v733 = vadd.f32 %v685, %v732
        %734 = vmatmul.f32.gmra.mxu0 %v707
        %v735 = vpop.f32.mrf.mxu0
        %v736 = vadd.f32 %v690, %v735
        %737 = vmatmul.f32.gmra.mxu0 %v710
        %v738 = vpop.f32.mrf.mxu0
        %v739 = vadd.f32 %v695, %v738
        %740 = vmatmul.f32.gmra.mxu0 %v713
        %v741 = vpop.f32.mrf.mxu0
        %v742 = vadd.f32 %v700, %v741
        %743 = vdwg.mxu0
        %744 = vmatpush.msra.mxu0 0.0
        %745 = vmatpush.msra.mxu0 0.0
        %746 = vmatpush.msra.mxu0 0.0
        %747 = vmatpush.msra.mxu0 0.0
        %748 = vmatpush.msra.mxu0 0.0
        %749 = vmatpush.msra.mxu0 0.0
        %750 = vmatpush.msra.mxu0 0.0
        %751 = vmatpush.msra.mxu0 0.0
        %752 = vmatpush.msra.mxu0 0.0
        %753 = vmatpush.msra.mxu0 0.0
        %754 = vmatpush.msra.mxu0 0.0
        %755 = vmatpush.msra.mxu0 0.0
        %756 = vmatpush.msra.mxu0 %v669
        %757 = vmatpush.msra.mxu0 %v665
        %758 = vmatpush.msra.mxu0 %v661
        %759 = vmatpush.msra.mxu0 %v657
        %760 = vmatmul.f32.gmra.mxu0 %v704
        %v761 = vpop.f32.mrf.mxu0
        %v762 = vadd.f32 %v685, %v761
        %763 = vmatmul.f32.gmra.mxu0 %v707
        %v764 = vpop.f32.mrf.mxu0
        %v765 = vadd.f32 %v690, %v764
        %766 = vmatmul.f32.gmra.mxu0 %v710
        %v767 = vpop.f32.mrf.mxu0
        %v768 = vadd.f32 %v695, %v767
        %769 = vmatmul.f32.gmra.mxu0 %v713
        %v770 = vpop.f32.mrf.mxu0
        %v771 = vadd.f32 %v700, %v770
        %772 = vdwg.mxu0
        %773 = vmatpush.msra.mxu0 0.0
        %774 = vmatpush.msra.mxu0 0.0
        %775 = vmatpush.msra.mxu0 0.0
        %776 = vmatpush.msra.mxu0 0.0
        %777 = vmatpush.msra.mxu0 0.0
        %778 = vmatpush.msra.mxu0 0.0
        %779 = vmatpush.msra.mxu0 0.0
        %780 = vmatpush.msra.mxu0 0.0
        %781 = vmatpush.msra.mxu0 0.0
        %782 = vmatpush.msra.mxu0 0.0
        %783 = vmatpush.msra.mxu0 0.0
        %784 = vmatpush.msra.mxu0 0.0
        %785 = vmatpush.msra.mxu0 %v670
        %786 = vmatpush.msra.mxu0 %v666
        %787 = vmatpush.msra.mxu0 %v662
        %788 = vmatpush.msra.mxu0 %v658
        %789 = vmatmul.f32.gmra.mxu0 %v704
        %v790 = vpop.f32.mrf.mxu0
        %v791 = vadd.f32 %v685, %v790
        %792 = vmatmul.f32.gmra.mxu0 %v707
        %v793 = vpop.f32.mrf.mxu0
        %v794 = vadd.f32 %v690, %v793
        %795 = vmatmul.f32.gmra.mxu0 %v710
        %v796 = vpop.f32.mrf.mxu0
        %v797 = vadd.f32 %v695, %v796
        %798 = vmatmul.f32.gmra.mxu0 %v713
        %v799 = vpop.f32.mrf.mxu0
        %v800 = vadd.f32 %v700, %v799
        %801 = vdwg.mxu0
        %802 = vmatpush.msra.mxu0 0.0
        %803 = vmatpush.msra.mxu0 0.0
        %804 = vmatpush.msra.mxu0 0.0
        %805 = vmatpush.msra.mxu0 0.0
        %806 = vmatpush.msra.mxu0 0.0
        %807 = vmatpush.msra.mxu0 0.0
        %808 = vmatpush.msra.mxu0 0.0
        %809 = vmatpush.msra.mxu0 0.0
        %810 = vmatpush.msra.mxu0 0.0
        %811 = vmatpush.msra.mxu0 0.0
        %812 = vmatpush.msra.mxu0 0.0
        %813 = vmatpush.msra.mxu0 0.0
        %814 = vmatpush.msra.mxu0 %v671
        %815 = vmatpush.msra.mxu0 %v667
        %816 = vmatpush.msra.mxu0 %v663
        %817 = vmatpush.msra.mxu0 %v659
        %818 = vmatmul.f32.gmra.mxu0 %v704
        %v819 = vpop.f32.mrf.mxu0
        %v820 = vadd.f32 %v685, %v819
        %821 = vmatmul.f32.gmra.mxu0 %v707
        %v822 = vpop.f32.mrf.mxu0
        %v823 = vadd.f32 %v690, %v822
        %824 = vmatmul.f32.gmra.mxu0 %v710
        %v825 = vpop.f32.mrf.mxu0
        %v826 = vadd.f32 %v695, %v825
        %827 = vmatmul.f32.gmra.mxu0 %v713
        %v828 = vpop.f32.mrf.mxu0
        %v829 = vadd.f32 %v700, %v828
        %830 = vdwg.mxu0
        %v831 = vxor.u32 %v733, 2147483648
        %v832 = vxor.u32 %v762, 2147483648
        %v833 = vxor.u32 %v791, 2147483648
        %v834 = vxor.u32 %v820, 2147483648
        %v835 = vxor.u32 %v736, 2147483648
        %v836 = vxor.u32 %v765, 2147483648
        %v837 = vxor.u32 %v794, 2147483648
        %v838 = vxor.u32 %v823, 2147483648
        %v839 = vxor.u32 %v739, 2147483648
        %v840 = vxor.u32 %v768, 2147483648
        %v841 = vxor.u32 %v797, 2147483648
        %v842 = vxor.u32 %v826, 2147483648
        %v843 = vxor.u32 %v742, 2147483648
        %v844 = vxor.u32 %v771, 2147483648
        %v845 = vxor.u32 %v800, 2147483648
        %v846 = vxor.u32 %v829, 2147483648
        %v847 = vmul.f32 %v831, 1.442695
        %v848 = vpow.pop %v847
        %v849 = vmul.f32 %v832, 1.442695
        %v850 = vpow.pop %v849
        %v851 = vmul.f32 %v833, 1.442695
        %v852 = vpow.pop %v851
        %v853 = vmul.f32 %v834, 1.442695
        %v854 = vpow.pop %v853
        %v855 = vmul.f32 %v835, 1.442695
        %v856 = vpow.pop %v855
        %v857 = vmul.f32 %v836, 1.442695
        %v858 = vpow.pop %v857
        %v859 = vmul.f32 %v837, 1.442695
        %v860 = vpow.pop %v859
        %v861 = vmul.f32 %v838, 1.442695
        %v862 = vpow.pop %v861
        %v863 = vmul.f32 %v839, 1.442695
        %v864 = vpow.pop %v863
        %v865 = vmul.f32 %v840, 1.442695
        %v866 = vpow.pop %v865
        %v867 = vmul.f32 %v841, 1.442695
        %v868 = vpow.pop %v867
        %v869 = vmul.f32 %v842, 1.442695
        %v870 = vpow.pop %v869
        %v871 = vmul.f32 %v843, 1.442695
        %v872 = vpow.pop %v871
        %v873 = vmul.f32 %v844, 1.442695
        %v874 = vpow.pop %v873
        %v875 = vmul.f32 %v845, 1.442695
        %v876 = vpow.pop %v875
        %v877 = vmul.f32 %v846, 1.442695
        %v878 = vpow.pop %v877
        %v879 = vadd.f32 %v848, 1.0
        %v880 = vadd.f32 %v850, 1.0
        %v881 = vadd.f32 %v852, 1.0
        %v882 = vadd.f32 %v854, 1.0
        %v883 = vadd.f32 %v856, 1.0
        %v884 = vadd.f32 %v858, 1.0
        %v885 = vadd.f32 %v860, 1.0
        %v886 = vadd.f32 %v862, 1.0
        %v887 = vadd.f32 %v864, 1.0
        %v888 = vadd.f32 %v866, 1.0
        %v889 = vadd.f32 %v868, 1.0
        %v890 = vadd.f32 %v870, 1.0
        %v891 = vadd.f32 %v872, 1.0
        %v892 = vadd.f32 %v874, 1.0
        %v893 = vadd.f32 %v876, 1.0
        %v894 = vadd.f32 %v878, 1.0
        %v895 = vrcp.pop %v879
        %v896 = vmul.f32 %v879, %v895
        %v897 = vsub.f32 1.0, %v896
        %v898 = vmul.f32 %v895, %v897
        %v899 = vadd.f32 %v895, %v898
        %vm900 = vweird.f32 %v879
        %vm901 = vweird.f32 %v895
        %vm902 = vmor %vm900, %vm901
        %v903 = vsel %vm902, %v895, %v899
        %v904 = vand.u32 2147483647, %v879
        %vm905 = vcmp.eq.f32.partialorder %v904, 8.507059e+37
        %v906 = vand.u32 %v879, 2147483648
        %v907 = vor.u32 1.1754944e-38, %v906
        %v908 = vsel %vm905, %v907, %v903
        %v909 = vmul.f32 1.0, %v908
        %v910 = vrcp.pop %v880
        %v911 = vmul.f32 %v880, %v910
        %v912 = vsub.f32 1.0, %v911
        %v913 = vmul.f32 %v910, %v912
        %v914 = vadd.f32 %v910, %v913
        %vm915 = vweird.f32 %v880
        %vm916 = vweird.f32 %v910
        %vm917 = vmor %vm915, %vm916
        %v918 = vsel %vm917, %v910, %v914
        %v919 = vand.u32 2147483647, %v880
        %vm920 = vcmp.eq.f32.partialorder %v919, 8.507059e+37
        %v921 = vand.u32 %v880, 2147483648
        %v922 = vor.u32 1.1754944e-38, %v921
        %v923 = vsel %vm920, %v922, %v918
        %v924 = vmul.f32 1.0, %v923
        %v925 = vrcp.pop %v881
        %v926 = vmul.f32 %v881, %v925
        %v927 = vsub.f32 1.0, %v926
        %v928 = vmul.f32 %v925, %v927
        %v929 = vadd.f32 %v925, %v928
        %vm930 = vweird.f32 %v881
        %vm931 = vweird.f32 %v925
        %vm932 = vmor %vm930, %vm931
        %v933 = vsel %vm932, %v925, %v929
        %v934 = vand.u32 2147483647, %v881
        %vm935 = vcmp.eq.f32.partialorder %v934, 8.507059e+37
        %v936 = vand.u32 %v881, 2147483648
        %v937 = vor.u32 1.1754944e-38, %v936
        %v938 = vsel %vm935, %v937, %v933
        %v939 = vmul.f32 1.0, %v938
        %v940 = vrcp.pop %v882
        %v941 = vmul.f32 %v882, %v940
        %v942 = vsub.f32 1.0, %v941
        %v943 = vmul.f32 %v940, %v942
        %v944 = vadd.f32 %v940, %v943
        %vm945 = vweird.f32 %v882
        %vm946 = vweird.f32 %v940
        %vm947 = vmor %vm945, %vm946
        %v948 = vsel %vm947, %v940, %v944
        %v949 = vand.u32 2147483647, %v882
        %vm950 = vcmp.eq.f32.partialorder %v949, 8.507059e+37
        %v951 = vand.u32 %v882, 2147483648
        %v952 = vor.u32 1.1754944e-38, %v951
        %v953 = vsel %vm950, %v952, %v948
        %v954 = vmul.f32 1.0, %v953
        %v955 = vrcp.pop %v883
        %v956 = vmul.f32 %v883, %v955
        %v957 = vsub.f32 1.0, %v956
        %v958 = vmul.f32 %v955, %v957
        %v959 = vadd.f32 %v955, %v958
        %vm960 = vweird.f32 %v883
        %vm961 = vweird.f32 %v955
        %vm962 = vmor %vm960, %vm961
        %v963 = vsel %vm962, %v955, %v959
        %v964 = vand.u32 2147483647, %v883
        %vm965 = vcmp.eq.f32.partialorder %v964, 8.507059e+37
        %v966 = vand.u32 %v883, 2147483648
        %v967 = vor.u32 1.1754944e-38, %v966
        %v968 = vsel %vm965, %v967, %v963
        %v969 = vmul.f32 1.0, %v968
        %v970 = vrcp.pop %v884
        %v971 = vmul.f32 %v884, %v970
        %v972 = vsub.f32 1.0, %v971
        %v973 = vmul.f32 %v970, %v972
        %v974 = vadd.f32 %v970, %v973
        %vm975 = vweird.f32 %v884
        %vm976 = vweird.f32 %v970
        %vm977 = vmor %vm975, %vm976
        %v978 = vsel %vm977, %v970, %v974
        %v979 = vand.u32 2147483647, %v884
        %vm980 = vcmp.eq.f32.partialorder %v979, 8.507059e+37
        %v981 = vand.u32 %v884, 2147483648
        %v982 = vor.u32 1.1754944e-38, %v981
        %v983 = vsel %vm980, %v982, %v978
        %v984 = vmul.f32 1.0, %v983
        %v985 = vrcp.pop %v885
        %v986 = vmul.f32 %v885, %v985
        %v987 = vsub.f32 1.0, %v986
        %v988 = vmul.f32 %v985, %v987
        %v989 = vadd.f32 %v985, %v988
        %vm990 = vweird.f32 %v885
        %vm991 = vweird.f32 %v985
        %vm992 = vmor %vm990, %vm991
        %v993 = vsel %vm992, %v985, %v989
        %v994 = vand.u32 2147483647, %v885
        %vm995 = vcmp.eq.f32.partialorder %v994, 8.507059e+37
        %v996 = vand.u32 %v885, 2147483648
        %v997 = vor.u32 1.1754944e-38, %v996
        %v998 = vsel %vm995, %v997, %v993
        %v999 = vmul.f32 1.0, %v998
        %v1000 = vrcp.pop %v886
        %v1001 = vmul.f32 %v886, %v1000
        %v1002 = vsub.f32 1.0, %v1001
        %v1003 = vmul.f32 %v1000, %v1002
        %v1004 = vadd.f32 %v1000, %v1003
        %vm1005 = vweird.f32 %v886
        %vm1006 = vweird.f32 %v1000
        %vm1007 = vmor %vm1005, %vm1006
        %v1008 = vsel %vm1007, %v1000, %v1004
        %v1009 = vand.u32 2147483647, %v886
        %vm1010 = vcmp.eq.f32.partialorder %v1009, 8.507059e+37
        %v1011 = vand.u32 %v886, 2147483648
        %v1012 = vor.u32 1.1754944e-38, %v1011
        %v1013 = vsel %vm1010, %v1012, %v1008
        %v1014 = vmul.f32 1.0, %v1013
        %v1015 = vrcp.pop %v887
        %v1016 = vmul.f32 %v887, %v1015
        %v1017 = vsub.f32 1.0, %v1016
        %v1018 = vmul.f32 %v1015, %v1017
        %v1019 = vadd.f32 %v1015, %v1018
        %vm1020 = vweird.f32 %v887
        %vm1021 = vweird.f32 %v1015
        %vm1022 = vmor %vm1020, %vm1021
        %v1023 = vsel %vm1022, %v1015, %v1019
        %v1024 = vand.u32 2147483647, %v887
        %vm1025 = vcmp.eq.f32.partialorder %v1024, 8.507059e+37
        %v1026 = vand.u32 %v887, 2147483648
        %v1027 = vor.u32 1.1754944e-38, %v1026
        %v1028 = vsel %vm1025, %v1027, %v1023
        %v1029 = vmul.f32 1.0, %v1028
        %v1030 = vrcp.pop %v888
        %v1031 = vmul.f32 %v888, %v1030
        %v1032 = vsub.f32 1.0, %v1031
        %v1033 = vmul.f32 %v1030, %v1032
        %v1034 = vadd.f32 %v1030, %v1033
        %vm1035 = vweird.f32 %v888
        %vm1036 = vweird.f32 %v1030
        %vm1037 = vmor %vm1035, %vm1036
        %v1038 = vsel %vm1037, %v1030, %v1034
        %v1039 = vand.u32 2147483647, %v888
        %vm1040 = vcmp.eq.f32.partialorder %v1039, 8.507059e+37
        %v1041 = vand.u32 %v888, 2147483648
        %v1042 = vor.u32 1.1754944e-38, %v1041
        %v1043 = vsel %vm1040, %v1042, %v1038
        %v1044 = vmul.f32 1.0, %v1043
        %v1045 = vrcp.pop %v889
        %v1046 = vmul.f32 %v889, %v1045
        %v1047 = vsub.f32 1.0, %v1046
        %v1048 = vmul.f32 %v1045, %v1047
        %v1049 = vadd.f32 %v1045, %v1048
        %vm1050 = vweird.f32 %v889
        %vm1051 = vweird.f32 %v1045
        %vm1052 = vmor %vm1050, %vm1051
        %v1053 = vsel %vm1052, %v1045, %v1049
        %v1054 = vand.u32 2147483647, %v889
        %vm1055 = vcmp.eq.f32.partialorder %v1054, 8.507059e+37
        %v1056 = vand.u32 %v889, 2147483648
        %v1057 = vor.u32 1.1754944e-38, %v1056
        %v1058 = vsel %vm1055, %v1057, %v1053
        %v1059 = vmul.f32 1.0, %v1058
        %v1060 = vrcp.pop %v890
        %v1061 = vmul.f32 %v890, %v1060
        %v1062 = vsub.f32 1.0, %v1061
        %v1063 = vmul.f32 %v1060, %v1062
        %v1064 = vadd.f32 %v1060, %v1063
        %vm1065 = vweird.f32 %v890
        %vm1066 = vweird.f32 %v1060
        %vm1067 = vmor %vm1065, %vm1066
        %v1068 = vsel %vm1067, %v1060, %v1064
        %v1069 = vand.u32 2147483647, %v890
        %vm1070 = vcmp.eq.f32.partialorder %v1069, 8.507059e+37
        %v1071 = vand.u32 %v890, 2147483648
        %v1072 = vor.u32 1.1754944e-38, %v1071
        %v1073 = vsel %vm1070, %v1072, %v1068
        %v1074 = vmul.f32 1.0, %v1073
        %v1075 = vrcp.pop %v891
        %v1076 = vmul.f32 %v891, %v1075
        %v1077 = vsub.f32 1.0, %v1076
        %v1078 = vmul.f32 %v1075, %v1077
        %v1079 = vadd.f32 %v1075, %v1078
        %vm1080 = vweird.f32 %v891
        %vm1081 = vweird.f32 %v1075
        %vm1082 = vmor %vm1080, %vm1081
        %v1083 = vsel %vm1082, %v1075, %v1079
        %v1084 = vand.u32 2147483647, %v891
        %vm1085 = vcmp.eq.f32.partialorder %v1084, 8.507059e+37
        %v1086 = vand.u32 %v891, 2147483648
        %v1087 = vor.u32 1.1754944e-38, %v1086
        %v1088 = vsel %vm1085, %v1087, %v1083
        %v1089 = vmul.f32 1.0, %v1088
        %v1090 = vrcp.pop %v892
        %v1091 = vmul.f32 %v892, %v1090
        %v1092 = vsub.f32 1.0, %v1091
        %v1093 = vmul.f32 %v1090, %v1092
        %v1094 = vadd.f32 %v1090, %v1093
        %vm1095 = vweird.f32 %v892
        %vm1096 = vweird.f32 %v1090
        %vm1097 = vmor %vm1095, %vm1096
        %v1098 = vsel %vm1097, %v1090, %v1094
        %v1099 = vand.u32 2147483647, %v892
        %vm1100 = vcmp.eq.f32.partialorder %v1099, 8.507059e+37
        %v1101 = vand.u32 %v892, 2147483648
        %v1102 = vor.u32 1.1754944e-38, %v1101
        %v1103 = vsel %vm1100, %v1102, %v1098
        %v1104 = vmul.f32 1.0, %v1103
        %v1105 = vrcp.pop %v893
        %v1106 = vmul.f32 %v893, %v1105
        %v1107 = vsub.f32 1.0, %v1106
        %v1108 = vmul.f32 %v1105, %v1107
        %v1109 = vadd.f32 %v1105, %v1108
        %vm1110 = vweird.f32 %v893
        %vm1111 = vweird.f32 %v1105
        %vm1112 = vmor %vm1110, %vm1111
        %v1113 = vsel %vm1112, %v1105, %v1109
        %v1114 = vand.u32 2147483647, %v893
        %vm1115 = vcmp.eq.f32.partialorder %v1114, 8.507059e+37
        %v1116 = vand.u32 %v893, 2147483648
        %v1117 = vor.u32 1.1754944e-38, %v1116
        %v1118 = vsel %vm1115, %v1117, %v1113
        %v1119 = vmul.f32 1.0, %v1118
        %v1120 = vrcp.pop %v894
        %v1121 = vmul.f32 %v894, %v1120
        %v1122 = vsub.f32 1.0, %v1121
        %v1123 = vmul.f32 %v1120, %v1122
        %v1124 = vadd.f32 %v1120, %v1123
        %vm1125 = vweird.f32 %v894
        %vm1126 = vweird.f32 %v1120
        %vm1127 = vmor %vm1125, %vm1126
        %v1128 = vsel %vm1127, %v1120, %v1124
        %v1129 = vand.u32 2147483647, %v894
        %vm1130 = vcmp.eq.f32.partialorder %v1129, 8.507059e+37
        %v1131 = vand.u32 %v894, 2147483648
        %v1132 = vor.u32 1.1754944e-38, %v1131
        %v1133 = vsel %vm1130, %v1132, %v1128
        %v1134 = vmul.f32 1.0, %v1133
        %v1135 = vmul.f32 %v733, %v909
        %v1136 = vmul.f32 %v762, %v924
        %v1137 = vmul.f32 %v791, %v939
        %v1138 = vmul.f32 %v820, %v954
        %v1139 = vmul.f32 %v736, %v969
        %v1140 = vmul.f32 %v765, %v984
        %v1141 = vmul.f32 %v794, %v999
        %v1142 = vmul.f32 %v823, %v1014
        %v1143 = vmul.f32 %v739, %v1029
        %v1144 = vmul.f32 %v768, %v1044
        %v1145 = vmul.f32 %v797, %v1059
        %v1146 = vmul.f32 %v826, %v1074
        %v1147 = vmul.f32 %v742, %v1089
        %v1148 = vmul.f32 %v771, %v1104
        %v1149 = vmul.f32 %v800, %v1119
        %v1150 = vmul.f32 %v829, %v1134
        %s1151 = scalar_lea.vmem %s1, 64
        %v1152 = vld [vmem:[%s1151] sm:$0xff]
        %v1153 = vld [vmem:[%s1151 + $0x8] sm:$0xff]
        %v1154 = vld [vmem:[%s1151 + $0x10] sm:$0xff]
        %v1155 = vld [vmem:[%s1151 + $0x18] sm:$0xff]
        %s1156 = scalar_lea.vmem %s2, 64
        %v1157 = vld [vmem:[%s1156] sm:$0xff]
        %v1158 = vld [vmem:[%s1156 + $0x8] sm:$0xff]
        %v1159 = vld [vmem:[%s1156 + $0x10] sm:$0xff]
        %v1160 = vld [vmem:[%s1156 + $0x18] sm:$0xff]
        %1162 = vset.pattern.permute.xlu0 0
        %1163 = vperm.xlu0 %1162, %v1157
        %v1164 = vpop.permute.xlu0 %1163
        %1167 = vset.pattern.permute.xlu0 0
        %1168 = vperm.xlu0 %1167, %v1158
        %v1169 = vpop.permute.xlu0 %1168
        %1172 = vset.pattern.permute.xlu0 0
        %1173 = vperm.xlu0 %1172, %v1159
        %v1174 = vpop.permute.xlu0 %1173
        %1177 = vset.pattern.permute.xlu0 0
        %1178 = vperm.xlu0 %1177, %v1160
        %v1179 = vpop.permute.xlu0 %1178
        %v1182 = vsel %vm702, %v1152, 0
        %v1185 = vsel %vm702, %v1153, 0
        %v1188 = vsel %vm702, %v1154, 0
        %v1191 = vsel %vm702, %v1155, 0
        %1193 = vmatpush.msra.mxu0 0.0
        %1194 = vmatpush.msra.mxu0 0.0
        %1195 = vmatpush.msra.mxu0 0.0
        %1196 = vmatpush.msra.mxu0 0.0
        %1197 = vmatpush.msra.mxu0 0.0
        %1198 = vmatpush.msra.mxu0 0.0
        %1199 = vmatpush.msra.mxu0 0.0
        %1200 = vmatpush.msra.mxu0 0.0
        %1201 = vmatpush.msra.mxu0 0.0
        %1202 = vmatpush.msra.mxu0 0.0
        %1203 = vmatpush.msra.mxu0 0.0
        %1204 = vmatpush.msra.mxu0 0.0
        %1205 = vmatpush.msra.mxu0 %v1147
        %1206 = vmatpush.msra.mxu0 %v1143
        %1207 = vmatpush.msra.mxu0 %v1139
        %1208 = vmatpush.msra.mxu0 %v1135
        %1209 = vmatmul.f32.gmra.mxu0 %v1182
        %v1210 = vpop.f32.mrf.mxu0
        %v1211 = vadd.f32 %v1164, %v1210
        %1212 = vmatmul.f32.gmra.mxu0 %v1185
        %v1213 = vpop.f32.mrf.mxu0
        %v1214 = vadd.f32 %v1169, %v1213
        %1215 = vmatmul.f32.gmra.mxu0 %v1188
        %v1216 = vpop.f32.mrf.mxu0
        %v1217 = vadd.f32 %v1174, %v1216
        %1218 = vmatmul.f32.gmra.mxu0 %v1191
        %v1219 = vpop.f32.mrf.mxu0
        %v1220 = vadd.f32 %v1179, %v1219
        %1221 = vdwg.mxu0
        %1222 = vmatpush.msra.mxu0 0.0
        %1223 = vmatpush.msra.mxu0 0.0
        %1224 = vmatpush.msra.mxu0 0.0
        %1225 = vmatpush.msra.mxu0 0.0
        %1226 = vmatpush.msra.mxu0 0.0
        %1227 = vmatpush.msra.mxu0 0.0
        %1228 = vmatpush.msra.mxu0 0.0
        %1229 = vmatpush.msra.mxu0 0.0
        %1230 = vmatpush.msra.mxu0 0.0
        %1231 = vmatpush.msra.mxu0 0.0
        %1232 = vmatpush.msra.mxu0 0.0
        %1233 = vmatpush.msra.mxu0 0.0
        %1234 = vmatpush.msra.mxu0 %v1148
        %1235 = vmatpush.msra.mxu0 %v1144
        %1236 = vmatpush.msra.mxu0 %v1140
        %1237 = vmatpush.msra.mxu0 %v1136
        %1238 = vmatmul.f32.gmra.mxu0 %v1182
        %v1239 = vpop.f32.mrf.mxu0
        %v1240 = vadd.f32 %v1164, %v1239
        %1241 = vmatmul.f32.gmra.mxu0 %v1185
        %v1242 = vpop.f32.mrf.mxu0
        %v1243 = vadd.f32 %v1169, %v1242
        %1244 = vmatmul.f32.gmra.mxu0 %v1188
        %v1245 = vpop.f32.mrf.mxu0
        %v1246 = vadd.f32 %v1174, %v1245
        %1247 = vmatmul.f32.gmra.mxu0 %v1191
        %v1248 = vpop.f32.mrf.mxu0
        %v1249 = vadd.f32 %v1179, %v1248
        %1250 = vdwg.mxu0
        %1251 = vmatpush.msra.mxu0 0.0
        %1252 = vmatpush.msra.mxu0 0.0
        %1253 = vmatpush.msra.mxu0 0.0
        %1254 = vmatpush.msra.mxu0 0.0
        %1255 = vmatpush.msra.mxu0 0.0
        %1256 = vmatpush.msra.mxu0 0.0
        %1257 = vmatpush.msra.mxu0 0.0
        %1258 = vmatpush.msra.mxu0 0.0
        %1259 = vmatpush.msra.mxu0 0.0
        %1260 = vmatpush.msra.mxu0 0.0
        %1261 = vmatpush.msra.mxu0 0.0
        %1262 = vmatpush.msra.mxu0 0.0
        %1263 = vmatpush.msra.mxu0 %v1149
        %1264 = vmatpush.msra.mxu0 %v1145
        %1265 = vmatpush.msra.mxu0 %v1141
        %1266 = vmatpush.msra.mxu0 %v1137
        %1267 = vmatmul.f32.gmra.mxu0 %v1182
        %v1268 = vpop.f32.mrf.mxu0
        %v1269 = vadd.f32 %v1164, %v1268
        %1270 = vmatmul.f32.gmra.mxu0 %v1185
        %v1271 = vpop.f32.mrf.mxu0
        %v1272 = vadd.f32 %v1169, %v1271
        %1273 = vmatmul.f32.gmra.mxu0 %v1188
        %v1274 = vpop.f32.mrf.mxu0
        %v1275 = vadd.f32 %v1174, %v1274
        %1276 = vmatmul.f32.gmra.mxu0 %v1191
        %v1277 = vpop.f32.mrf.mxu0
        %v1278 = vadd.f32 %v1179, %v1277
        %1279 = vdwg.mxu0
        %1280 = vmatpush.msra.mxu0 0.0
        %1281 = vmatpush.msra.mxu0 0.0
        %1282 = vmatpush.msra.mxu0 0.0
        %1283 = vmatpush.msra.mxu0 0.0
        %1284 = vmatpush.msra.mxu0 0.0
        %1285 = vmatpush.msra.mxu0 0.0
        %1286 = vmatpush.msra.mxu0 0.0
        %1287 = vmatpush.msra.mxu0 0.0
        %1288 = vmatpush.msra.mxu0 0.0
        %1289 = vmatpush.msra.mxu0 0.0
        %1290 = vmatpush.msra.mxu0 0.0
        %1291 = vmatpush.msra.mxu0 0.0
        %1292 = vmatpush.msra.mxu0 %v1150
        %1293 = vmatpush.msra.mxu0 %v1146
        %1294 = vmatpush.msra.mxu0 %v1142
        %1295 = vmatpush.msra.mxu0 %v1138
        %1296 = vmatmul.f32.gmra.mxu0 %v1182
        %v1297 = vpop.f32.mrf.mxu0
        %v1298 = vadd.f32 %v1164, %v1297
        %1299 = vmatmul.f32.gmra.mxu0 %v1185
        %v1300 = vpop.f32.mrf.mxu0
        %v1301 = vadd.f32 %v1169, %v1300
        %1302 = vmatmul.f32.gmra.mxu0 %v1188
        %v1303 = vpop.f32.mrf.mxu0
        %v1304 = vadd.f32 %v1174, %v1303
        %1305 = vmatmul.f32.gmra.mxu0 %v1191
        %v1306 = vpop.f32.mrf.mxu0
        %v1307 = vadd.f32 %v1179, %v1306
        %1308 = vdwg.mxu0
        %v1309 = vxor.u32 %v1211, 2147483648
        %v1310 = vxor.u32 %v1240, 2147483648
        %v1311 = vxor.u32 %v1269, 2147483648
        %v1312 = vxor.u32 %v1298, 2147483648
        %v1313 = vxor.u32 %v1214, 2147483648
        %v1314 = vxor.u32 %v1243, 2147483648
        %v1315 = vxor.u32 %v1272, 2147483648
        %v1316 = vxor.u32 %v1301, 2147483648
        %v1317 = vxor.u32 %v1217, 2147483648
        %v1318 = vxor.u32 %v1246, 2147483648
        %v1319 = vxor.u32 %v1275, 2147483648
        %v1320 = vxor.u32 %v1304, 2147483648
        %v1321 = vxor.u32 %v1220, 2147483648
        %v1322 = vxor.u32 %v1249, 2147483648
        %v1323 = vxor.u32 %v1278, 2147483648
        %v1324 = vxor.u32 %v1307, 2147483648
        %v1325 = vmul.f32 %v1309, 1.442695
        %v1326 = vpow.pop %v1325
        %v1327 = vmul.f32 %v1310, 1.442695
        %v1328 = vpow.pop %v1327
        %v1329 = vmul.f32 %v1311, 1.442695
        %v1330 = vpow.pop %v1329
        %v1331 = vmul.f32 %v1312, 1.442695
        %v1332 = vpow.pop %v1331
        %v1333 = vmul.f32 %v1313, 1.442695
        %v1334 = vpow.pop %v1333
        %v1335 = vmul.f32 %v1314, 1.442695
        %v1336 = vpow.pop %v1335
        %v1337 = vmul.f32 %v1315, 1.442695
        %v1338 = vpow.pop %v1337
        %v1339 = vmul.f32 %v1316, 1.442695
        %v1340 = vpow.pop %v1339
        %v1341 = vmul.f32 %v1317, 1.442695
        %v1342 = vpow.pop %v1341
        %v1343 = vmul.f32 %v1318, 1.442695
        %v1344 = vpow.pop %v1343
        %v1345 = vmul.f32 %v1319, 1.442695
        %v1346 = vpow.pop %v1345
        %v1347 = vmul.f32 %v1320, 1.442695
        %v1348 = vpow.pop %v1347
        %v1349 = vmul.f32 %v1321, 1.442695
        %v1350 = vpow.pop %v1349
        %v1351 = vmul.f32 %v1322, 1.442695
        %v1352 = vpow.pop %v1351
        %v1353 = vmul.f32 %v1323, 1.442695
        %v1354 = vpow.pop %v1353
        %v1355 = vmul.f32 %v1324, 1.442695
        %v1356 = vpow.pop %v1355
        %v1357 = vadd.f32 %v1326, 1.0
        %v1358 = vadd.f32 %v1328, 1.0
        %v1359 = vadd.f32 %v1330, 1.0
        %v1360 = vadd.f32 %v1332, 1.0
        %v1361 = vadd.f32 %v1334, 1.0
        %v1362 = vadd.f32 %v1336, 1.0
        %v1363 = vadd.f32 %v1338, 1.0
        %v1364 = vadd.f32 %v1340, 1.0
        %v1365 = vadd.f32 %v1342, 1.0
        %v1366 = vadd.f32 %v1344, 1.0
        %v1367 = vadd.f32 %v1346, 1.0
        %v1368 = vadd.f32 %v1348, 1.0
        %v1369 = vadd.f32 %v1350, 1.0
        %v1370 = vadd.f32 %v1352, 1.0
        %v1371 = vadd.f32 %v1354, 1.0
        %v1372 = vadd.f32 %v1356, 1.0
        %v1373 = vrcp.pop %v1357
        %v1374 = vmul.f32 %v1357, %v1373
        %v1375 = vsub.f32 1.0, %v1374
        %v1376 = vmul.f32 %v1373, %v1375
        %v1377 = vadd.f32 %v1373, %v1376
        %vm1378 = vweird.f32 %v1357
        %vm1379 = vweird.f32 %v1373
        %vm1380 = vmor %vm1378, %vm1379
        %v1381 = vsel %vm1380, %v1373, %v1377
        %v1382 = vand.u32 2147483647, %v1357
        %vm1383 = vcmp.eq.f32.partialorder %v1382, 8.507059e+37
        %v1384 = vand.u32 %v1357, 2147483648
        %v1385 = vor.u32 1.1754944e-38, %v1384
        %v1386 = vsel %vm1383, %v1385, %v1381
        %v1387 = vmul.f32 1.0, %v1386
        %v1388 = vrcp.pop %v1358
        %v1389 = vmul.f32 %v1358, %v1388
        %v1390 = vsub.f32 1.0, %v1389
        %v1391 = vmul.f32 %v1388, %v1390
        %v1392 = vadd.f32 %v1388, %v1391
        %vm1393 = vweird.f32 %v1358
        %vm1394 = vweird.f32 %v1388
        %vm1395 = vmor %vm1393, %vm1394
        %v1396 = vsel %vm1395, %v1388, %v1392
        %v1397 = vand.u32 2147483647, %v1358
        %vm1398 = vcmp.eq.f32.partialorder %v1397, 8.507059e+37
        %v1399 = vand.u32 %v1358, 2147483648
        %v1400 = vor.u32 1.1754944e-38, %v1399
        %v1401 = vsel %vm1398, %v1400, %v1396
        %v1402 = vmul.f32 1.0, %v1401
        %v1403 = vrcp.pop %v1359
        %v1404 = vmul.f32 %v1359, %v1403
        %v1405 = vsub.f32 1.0, %v1404
        %v1406 = vmul.f32 %v1403, %v1405
        %v1407 = vadd.f32 %v1403, %v1406
        %vm1408 = vweird.f32 %v1359
        %vm1409 = vweird.f32 %v1403
        %vm1410 = vmor %vm1408, %vm1409
        %v1411 = vsel %vm1410, %v1403, %v1407
        %v1412 = vand.u32 2147483647, %v1359
        %vm1413 = vcmp.eq.f32.partialorder %v1412, 8.507059e+37
        %v1414 = vand.u32 %v1359, 2147483648
        %v1415 = vor.u32 1.1754944e-38, %v1414
        %v1416 = vsel %vm1413, %v1415, %v1411
        %v1417 = vmul.f32 1.0, %v1416
        %v1418 = vrcp.pop %v1360
        %v1419 = vmul.f32 %v1360, %v1418
        %v1420 = vsub.f32 1.0, %v1419
        %v1421 = vmul.f32 %v1418, %v1420
        %v1422 = vadd.f32 %v1418, %v1421
        %vm1423 = vweird.f32 %v1360
        %vm1424 = vweird.f32 %v1418
        %vm1425 = vmor %vm1423, %vm1424
        %v1426 = vsel %vm1425, %v1418, %v1422
        %v1427 = vand.u32 2147483647, %v1360
        %vm1428 = vcmp.eq.f32.partialorder %v1427, 8.507059e+37
        %v1429 = vand.u32 %v1360, 2147483648
        %v1430 = vor.u32 1.1754944e-38, %v1429
        %v1431 = vsel %vm1428, %v1430, %v1426
        %v1432 = vmul.f32 1.0, %v1431
        %v1433 = vrcp.pop %v1361
        %v1434 = vmul.f32 %v1361, %v1433
        %v1435 = vsub.f32 1.0, %v1434
        %v1436 = vmul.f32 %v1433, %v1435
        %v1437 = vadd.f32 %v1433, %v1436
        %vm1438 = vweird.f32 %v1361
        %vm1439 = vweird.f32 %v1433
        %vm1440 = vmor %vm1438, %vm1439
        %v1441 = vsel %vm1440, %v1433, %v1437
        %v1442 = vand.u32 2147483647, %v1361
        %vm1443 = vcmp.eq.f32.partialorder %v1442, 8.507059e+37
        %v1444 = vand.u32 %v1361, 2147483648
        %v1445 = vor.u32 1.1754944e-38, %v1444
        %v1446 = vsel %vm1443, %v1445, %v1441
        %v1447 = vmul.f32 1.0, %v1446
        %v1448 = vrcp.pop %v1362
        %v1449 = vmul.f32 %v1362, %v1448
        %v1450 = vsub.f32 1.0, %v1449
        %v1451 = vmul.f32 %v1448, %v1450
        %v1452 = vadd.f32 %v1448, %v1451
        %vm1453 = vweird.f32 %v1362
        %vm1454 = vweird.f32 %v1448
        %vm1455 = vmor %vm1453, %vm1454
        %v1456 = vsel %vm1455, %v1448, %v1452
        %v1457 = vand.u32 2147483647, %v1362
        %vm1458 = vcmp.eq.f32.partialorder %v1457, 8.507059e+37
        %v1459 = vand.u32 %v1362, 2147483648
        %v1460 = vor.u32 1.1754944e-38, %v1459
        %v1461 = vsel %vm1458, %v1460, %v1456
        %v1462 = vmul.f32 1.0, %v1461
        %v1463 = vrcp.pop %v1363
        %v1464 = vmul.f32 %v1363, %v1463
        %v1465 = vsub.f32 1.0, %v1464
        %v1466 = vmul.f32 %v1463, %v1465
        %v1467 = vadd.f32 %v1463, %v1466
        %vm1468 = vweird.f32 %v1363
        %vm1469 = vweird.f32 %v1463
        %vm1470 = vmor %vm1468, %vm1469
        %v1471 = vsel %vm1470, %v1463, %v1467
        %v1472 = vand.u32 2147483647, %v1363
        %vm1473 = vcmp.eq.f32.partialorder %v1472, 8.507059e+37
        %v1474 = vand.u32 %v1363, 2147483648
        %v1475 = vor.u32 1.1754944e-38, %v1474
        %v1476 = vsel %vm1473, %v1475, %v1471
        %v1477 = vmul.f32 1.0, %v1476
        %v1478 = vrcp.pop %v1364
        %v1479 = vmul.f32 %v1364, %v1478
        %v1480 = vsub.f32 1.0, %v1479
        %v1481 = vmul.f32 %v1478, %v1480
        %v1482 = vadd.f32 %v1478, %v1481
        %vm1483 = vweird.f32 %v1364
        %vm1484 = vweird.f32 %v1478
        %vm1485 = vmor %vm1483, %vm1484
        %v1486 = vsel %vm1485, %v1478, %v1482
        %v1487 = vand.u32 2147483647, %v1364
        %vm1488 = vcmp.eq.f32.partialorder %v1487, 8.507059e+37
        %v1489 = vand.u32 %v1364, 2147483648
        %v1490 = vor.u32 1.1754944e-38, %v1489
        %v1491 = vsel %vm1488, %v1490, %v1486
        %v1492 = vmul.f32 1.0, %v1491
        %v1493 = vrcp.pop %v1365
        %v1494 = vmul.f32 %v1365, %v1493
        %v1495 = vsub.f32 1.0, %v1494
        %v1496 = vmul.f32 %v1493, %v1495
        %v1497 = vadd.f32 %v1493, %v1496
        %vm1498 = vweird.f32 %v1365
        %vm1499 = vweird.f32 %v1493
        %vm1500 = vmor %vm1498, %vm1499
        %v1501 = vsel %vm1500, %v1493, %v1497
        %v1502 = vand.u32 2147483647, %v1365
        %vm1503 = vcmp.eq.f32.partialorder %v1502, 8.507059e+37
        %v1504 = vand.u32 %v1365, 2147483648
        %v1505 = vor.u32 1.1754944e-38, %v1504
        %v1506 = vsel %vm1503, %v1505, %v1501
        %v1507 = vmul.f32 1.0, %v1506
        %v1508 = vrcp.pop %v1366
        %v1509 = vmul.f32 %v1366, %v1508
        %v1510 = vsub.f32 1.0, %v1509
        %v1511 = vmul.f32 %v1508, %v1510
        %v1512 = vadd.f32 %v1508, %v1511
        %vm1513 = vweird.f32 %v1366
        %vm1514 = vweird.f32 %v1508
        %vm1515 = vmor %vm1513, %vm1514
        %v1516 = vsel %vm1515, %v1508, %v1512
        %v1517 = vand.u32 2147483647, %v1366
        %vm1518 = vcmp.eq.f32.partialorder %v1517, 8.507059e+37
        %v1519 = vand.u32 %v1366, 2147483648
        %v1520 = vor.u32 1.1754944e-38, %v1519
        %v1521 = vsel %vm1518, %v1520, %v1516
        %v1522 = vmul.f32 1.0, %v1521
        %v1523 = vrcp.pop %v1367
        %v1524 = vmul.f32 %v1367, %v1523
        %v1525 = vsub.f32 1.0, %v1524
        %v1526 = vmul.f32 %v1523, %v1525
        %v1527 = vadd.f32 %v1523, %v1526
        %vm1528 = vweird.f32 %v1367
        %vm1529 = vweird.f32 %v1523
        %vm1530 = vmor %vm1528, %vm1529
        %v1531 = vsel %vm1530, %v1523, %v1527
        %v1532 = vand.u32 2147483647, %v1367
        %vm1533 = vcmp.eq.f32.partialorder %v1532, 8.507059e+37
        %v1534 = vand.u32 %v1367, 2147483648
        %v1535 = vor.u32 1.1754944e-38, %v1534
        %v1536 = vsel %vm1533, %v1535, %v1531
        %v1537 = vmul.f32 1.0, %v1536
        %v1538 = vrcp.pop %v1368
        %v1539 = vmul.f32 %v1368, %v1538
        %v1540 = vsub.f32 1.0, %v1539
        %v1541 = vmul.f32 %v1538, %v1540
        %v1542 = vadd.f32 %v1538, %v1541
        %vm1543 = vweird.f32 %v1368
        %vm1544 = vweird.f32 %v1538
        %vm1545 = vmor %vm1543, %vm1544
        %v1546 = vsel %vm1545, %v1538, %v1542
        %v1547 = vand.u32 2147483647, %v1368
        %vm1548 = vcmp.eq.f32.partialorder %v1547, 8.507059e+37
        %v1549 = vand.u32 %v1368, 2147483648
        %v1550 = vor.u32 1.1754944e-38, %v1549
        %v1551 = vsel %vm1548, %v1550, %v1546
        %v1552 = vmul.f32 1.0, %v1551
        %v1553 = vrcp.pop %v1369
        %v1554 = vmul.f32 %v1369, %v1553
        %v1555 = vsub.f32 1.0, %v1554
        %v1556 = vmul.f32 %v1553, %v1555
        %v1557 = vadd.f32 %v1553, %v1556
        %vm1558 = vweird.f32 %v1369
        %vm1559 = vweird.f32 %v1553
        %vm1560 = vmor %vm1558, %vm1559
        %v1561 = vsel %vm1560, %v1553, %v1557
        %v1562 = vand.u32 2147483647, %v1369
        %vm1563 = vcmp.eq.f32.partialorder %v1562, 8.507059e+37
        %v1564 = vand.u32 %v1369, 2147483648
        %v1565 = vor.u32 1.1754944e-38, %v1564
        %v1566 = vsel %vm1563, %v1565, %v1561
        %v1567 = vmul.f32 1.0, %v1566
        %v1568 = vrcp.pop %v1370
        %v1569 = vmul.f32 %v1370, %v1568
        %v1570 = vsub.f32 1.0, %v1569
        %v1571 = vmul.f32 %v1568, %v1570
        %v1572 = vadd.f32 %v1568, %v1571
        %vm1573 = vweird.f32 %v1370
        %vm1574 = vweird.f32 %v1568
        %vm1575 = vmor %vm1573, %vm1574
        %v1576 = vsel %vm1575, %v1568, %v1572
        %v1577 = vand.u32 2147483647, %v1370
        %vm1578 = vcmp.eq.f32.partialorder %v1577, 8.507059e+37
        %v1579 = vand.u32 %v1370, 2147483648
        %v1580 = vor.u32 1.1754944e-38, %v1579
        %v1581 = vsel %vm1578, %v1580, %v1576
        %v1582 = vmul.f32 1.0, %v1581
        %v1583 = vrcp.pop %v1371
        %v1584 = vmul.f32 %v1371, %v1583
        %v1585 = vsub.f32 1.0, %v1584
        %v1586 = vmul.f32 %v1583, %v1585
        %v1587 = vadd.f32 %v1583, %v1586
        %vm1588 = vweird.f32 %v1371
        %vm1589 = vweird.f32 %v1583
        %vm1590 = vmor %vm1588, %vm1589
        %v1591 = vsel %vm1590, %v1583, %v1587
        %v1592 = vand.u32 2147483647, %v1371
        %vm1593 = vcmp.eq.f32.partialorder %v1592, 8.507059e+37
        %v1594 = vand.u32 %v1371, 2147483648
        %v1595 = vor.u32 1.1754944e-38, %v1594
        %v1596 = vsel %vm1593, %v1595, %v1591
        %v1597 = vmul.f32 1.0, %v1596
        %v1598 = vrcp.pop %v1372
        %v1599 = vmul.f32 %v1372, %v1598
        %v1600 = vsub.f32 1.0, %v1599
        %v1601 = vmul.f32 %v1598, %v1600
        %v1602 = vadd.f32 %v1598, %v1601
        %vm1603 = vweird.f32 %v1372
        %vm1604 = vweird.f32 %v1598
        %vm1605 = vmor %vm1603, %vm1604
        %v1606 = vsel %vm1605, %v1598, %v1602
        %v1607 = vand.u32 2147483647, %v1372
        %vm1608 = vcmp.eq.f32.partialorder %v1607, 8.507059e+37
        %v1609 = vand.u32 %v1372, 2147483648
        %v1610 = vor.u32 1.1754944e-38, %v1609
        %v1611 = vsel %vm1608, %v1610, %v1606
        %v1612 = vmul.f32 1.0, %v1611
        %v1613 = vmul.f32 %v1211, %v1387
        %v1614 = vmul.f32 %v1240, %v1402
        %v1615 = vmul.f32 %v1269, %v1417
        %v1616 = vmul.f32 %v1298, %v1432
        %v1617 = vmul.f32 %v1214, %v1447
        %v1618 = vmul.f32 %v1243, %v1462
        %v1619 = vmul.f32 %v1272, %v1477
        %v1620 = vmul.f32 %v1301, %v1492
        %v1621 = vmul.f32 %v1217, %v1507
        %v1622 = vmul.f32 %v1246, %v1522
        %v1623 = vmul.f32 %v1275, %v1537
        %v1624 = vmul.f32 %v1304, %v1552
        %v1625 = vmul.f32 %v1220, %v1567
        %v1626 = vmul.f32 %v1249, %v1582
        %v1627 = vmul.f32 %v1278, %v1597
        %v1628 = vmul.f32 %v1307, %v1612
        %s1629 = scalar_lea.vmem %s1, 96
        %v1630 = vld [vmem:[%s1629] sm:$0xff]
        %s1631 = scalar_lea.vmem %s2, 96
        %v1632 = vld [vmem:[%s1631] sm:$0xff]
        %1634 = vset.pattern.permute.xlu0 0
        %1635 = vperm.xlu0 %1634, %v1632
        %v1636 = vpop.permute.xlu0 %1635
        %v1639 = vsel %vm702, %v1630, 0
        %1641 = vmatpush.msra.mxu0 0.0
        %1642 = vmatpush.msra.mxu0 0.0
        %1643 = vmatpush.msra.mxu0 0.0
        %1644 = vmatpush.msra.mxu0 0.0
        %1645 = vmatpush.msra.mxu0 0.0
        %1646 = vmatpush.msra.mxu0 0.0
        %1647 = vmatpush.msra.mxu0 0.0
        %1648 = vmatpush.msra.mxu0 0.0
        %1649 = vmatpush.msra.mxu0 0.0
        %1650 = vmatpush.msra.mxu0 0.0
        %1651 = vmatpush.msra.mxu0 0.0
        %1652 = vmatpush.msra.mxu0 0.0
        %1653 = vmatpush.msra.mxu0 %v1625
        %1654 = vmatpush.msra.mxu0 %v1621
        %1655 = vmatpush.msra.mxu0 %v1617
        %1656 = vmatpush.msra.mxu0 %v1613
        %1657 = vmatmul.f32.gmra.mxu0 %v1639
        %v1658 = vpop.f32.mrf.mxu0
        %v1659 = vadd.f32 %v1636, %v1658
        %1660 = vdwg.mxu0
        %1661 = vmatpush.msra.mxu0 0.0
        %1662 = vmatpush.msra.mxu0 0.0
        %1663 = vmatpush.msra.mxu0 0.0
        %1664 = vmatpush.msra.mxu0 0.0
        %1665 = vmatpush.msra.mxu0 0.0
        %1666 = vmatpush.msra.mxu0 0.0
        %1667 = vmatpush.msra.mxu0 0.0
        %1668 = vmatpush.msra.mxu0 0.0
        %1669 = vmatpush.msra.mxu0 0.0
        %1670 = vmatpush.msra.mxu0 0.0
        %1671 = vmatpush.msra.mxu0 0.0
        %1672 = vmatpush.msra.mxu0 0.0
        %1673 = vmatpush.msra.mxu0 %v1626
        %1674 = vmatpush.msra.mxu0 %v1622
        %1675 = vmatpush.msra.mxu0 %v1618
        %1676 = vmatpush.msra.mxu0 %v1614
        %1677 = vmatmul.f32.gmra.mxu0 %v1639
        %v1678 = vpop.f32.mrf.mxu0
        %v1679 = vadd.f32 %v1636, %v1678
        %1680 = vdwg.mxu0
        %1681 = vmatpush.msra.mxu0 0.0
        %1682 = vmatpush.msra.mxu0 0.0
        %1683 = vmatpush.msra.mxu0 0.0
        %1684 = vmatpush.msra.mxu0 0.0
        %1685 = vmatpush.msra.mxu0 0.0
        %1686 = vmatpush.msra.mxu0 0.0
        %1687 = vmatpush.msra.mxu0 0.0
        %1688 = vmatpush.msra.mxu0 0.0
        %1689 = vmatpush.msra.mxu0 0.0
        %1690 = vmatpush.msra.mxu0 0.0
        %1691 = vmatpush.msra.mxu0 0.0
        %1692 = vmatpush.msra.mxu0 0.0
        %1693 = vmatpush.msra.mxu0 %v1627
        %1694 = vmatpush.msra.mxu0 %v1623
        %1695 = vmatpush.msra.mxu0 %v1619
        %1696 = vmatpush.msra.mxu0 %v1615
        %1697 = vmatmul.f32.gmra.mxu0 %v1639
        %v1698 = vpop.f32.mrf.mxu0
        %v1699 = vadd.f32 %v1636, %v1698
        %1700 = vdwg.mxu0
        %1701 = vmatpush.msra.mxu0 0.0
        %1702 = vmatpush.msra.mxu0 0.0
        %1703 = vmatpush.msra.mxu0 0.0
        %1704 = vmatpush.msra.mxu0 0.0
        %1705 = vmatpush.msra.mxu0 0.0
        %1706 = vmatpush.msra.mxu0 0.0
        %1707 = vmatpush.msra.mxu0 0.0
        %1708 = vmatpush.msra.mxu0 0.0
        %1709 = vmatpush.msra.mxu0 0.0
        %1710 = vmatpush.msra.mxu0 0.0
        %1711 = vmatpush.msra.mxu0 0.0
        %1712 = vmatpush.msra.mxu0 0.0
        %1713 = vmatpush.msra.mxu0 %v1628
        %1714 = vmatpush.msra.mxu0 %v1624
        %1715 = vmatpush.msra.mxu0 %v1620
        %1716 = vmatpush.msra.mxu0 %v1616
        %1717 = vmatmul.f32.gmra.mxu0 %v1639
        %v1718 = vpop.f32.mrf.mxu0
        %v1719 = vadd.f32 %v1636, %v1718
        %1720 = vdwg.mxu0
        %1721 = vst [vmem:[%s188] sm:$0xff] %v1659
        %1722 = vst [vmem:[%s188 + $0x8] sm:$0xff] %v1679
        %1723 = vst [vmem:[%s188 + $0x10] sm:$0xff] %v1699
        %1724 = vst [vmem:[%s188 + $0x18] sm:$0xff] %v1719
        %s1725 = sand.u32 %s96, 1
        %s1726 = scalar_lea.sflag [#allocation4], %s1725
        %s1727 = sand.u32 %s96, 1
        %s1728 = smul.addr %s1727, 32
        %s1729 = scalar_lea.vmem [#allocation5], %s1728
        // Predicated region
        $region37: #{tpu_custom_call.1} parent=31 // pred_check
          %p1730 = pneg %p106
        $region38: #{tpu_custom_call.1} parent=31 // pred_check_branch
          %1732 = sbr.rel (%p1730) target = $region40
        $region39: #{tpu_custom_call.1} parent=31 // pred_region
          %s1733 = smul.u32 4, %s20
          %1735 = vsyncadd %s1726, 0
          %s1736 = smul.addr %s1733, 8
          %s1737 = scalar_lea.hbm %s3, %s1736
          %s1739 = sshll.u32 %s1729, 4
          %s1740 = int_to_ptr.vmem [resolvable:$true] %s1739
          %s1741 = sshll.u32 %s1737, 4
          %s1742 = int_to_ptr.hbm [resolvable:$true] %s1741
          %1744 = dma.vmem_to_hbm [thread:$0]  %s1740, 512, %s1742, %s1726
        $region40: #{tpu_custom_call.1} parent=31 // pred_fallthru
          _
      $region32: #{tpu_custom_call.1} parent=5 // pred_fallthru
        _
      %p1745 = scmp.le.s32.totalorder 2, %s15
      // Predicated region
      $region41: #{tpu_custom_call.1} parent=5 // pred_check
        %p1746 = pneg %p1745
      $region42: #{tpu_custom_call.1} parent=5 // pred_check_branch
        %1748 = sbr.rel (%p1746) target = $region44
      $region43: #{tpu_custom_call.1} parent=5 // pred_region
        %s1749 = ssub.s32 %s15, 2
        // Predicated region
        $region45: #{tpu_custom_call.1} parent=43 // pred_check
          %p1750 = pneg %p112
        $region46: #{tpu_custom_call.1} parent=43 // pred_check_branch
          %1752 = sbr.rel (%p1750) target = $region48
        $region47: #{tpu_custom_call.1} parent=43 // pred_region
          %s1753 = sand.u32 %s97, 1
          %s1754 = scalar_lea.sflag [#allocation4], %s1753
          %s1755 = sand.u32 %s97, 1
          %s1756 = smul.addr %s1755, 32
          %s1757 = scalar_lea.vmem [#allocation5], %s1756
          %1759 = dma.done %s1754, 512
        $region48: #{tpu_custom_call.1} parent=43 // pred_fallthru
          _
      $region44: #{tpu_custom_call.1} parent=5 // pred_fallthru
        _
    $region6: #{tpu_custom_call.1} parent=1 // loop_footer
      %s19 = sadd.s32 1, %s15
    $region7: #{tpu_custom_call.1} parent=1 // loop_footer_branch
      %14 = sbr.rel target = $region3
    $region8: #{tpu_custom_call.1} parent=1 // loop_exit
      _
    %1760 = vsyncpa [#allocation3], 1
    %s1761 = scalar_lea.sflag [#allocation3], 1
    %1762 = vsyncpa %s1761, 1
    %1763 = vsyncpa [#allocation4], 1
    %s1764 = scalar_lea.sflag [#allocation4], 1
    %1765 = vsyncpa %s1764, 1

</llo_original>
